<compile_context>
chip_gen: v7x
topology: tpu7x:2x2x1
jax: 0.10.0
libtpu: 0.0.40
codegen_flags: <defaults>
</compile_context>

<pallas_src>
import numpy as np
import jax
import jax.numpy as jnp
from jax.experimental import pallas as pl
from jax.experimental.pallas import tpu as pltpu


# ----------------------------------------------------------------------------
# Fused Pallas kernel (one batch element per grid step)
# ----------------------------------------------------------------------------
def _unet_innermost_kernel(x_ref, wd_ref, bd_ref, wu_ref, bu_ref, o_ref):
    """Fused innermost UNet block.

    x_ref : (1, H, Wo, 2*Cin)    W-parity merged input: x_ref[0,h,t,q*Cin+c] == x[h, 2t+q, c]
    wd_ref: (16*Cin, Cm)  bf16   down-conv weights, natural (kh, kw, cin) flatten
    bd_ref: (1, Cm)       f32
    wu_ref: (12*Cm, 2*Cout) bf16 up-conv weights rearranged for parity-split compute
    bu_ref: (1, 2*Cout)   f32    up bias duplicated for both output column parities
    o_ref : (1, H, Wo, 2*(Cin+Cout))  W-parity merged concat([x, x_dec], channels)
    """
    H, Wo = x_ref.shape[1], x_ref.shape[2]
    Cin = x_ref.shape[3] // 2
    Ho = H // 2
    Cm = wd_ref.shape[1]
    Cout = wu_ref.shape[1] // 2

    xm = x_ref[0]                                               # (H, Wo, 2*Cin) f32

    # ---- zero pad (pad=1) built entirely in VMEM, still W-parity merged ---------
    zc = jnp.zeros((H, 1, Cin), xm.dtype)
    par0 = jnp.concatenate([zc, xm[:, :, Cin:]], axis=1)        # even padded cols
    par1 = jnp.concatenate([xm[:, :, :Cin], zc], axis=1)        # odd padded cols
    rows = jnp.concatenate([par0, par1], axis=-1)               # (H, Wo+1, 2*Cin)
    zr = jnp.zeros((1, Wo + 1, 2 * Cin), xm.dtype)
    xpad = jnp.concatenate([zr, rows, zr], axis=0)              # (H+2, Wo+1, 2*Cin)
    xr = xpad.reshape(Ho + 1, 2, Wo + 1, 2 * Cin)               # H-parity split (leading dims only)

    # ---- down conv: 4x4 stride-2 as ONE im2col matmul (K = 16*Cin) --------------
    taps = []
    for kh in range(4):
        a, p = kh // 2, kh % 2
        for b in range(2):                                      # b = kw // 2; kw%2 lives in channels
            taps.append(xr[a:a + Ho, p, b:b + Wo, :])           # (Ho, Wo, 2*Cin)
    patch_d = jnp.concatenate(taps, axis=-1)                    # (Ho, Wo, 16*Cin)
    acc_d = jnp.dot(patch_d.reshape(Ho * Wo, 16 * Cin).astype(jnp.bfloat16),
                    wd_ref[...], preferred_element_type=jnp.float32)
    acc_d = acc_d + bd_ref[...]
    acc_d = jnp.where(acc_d > 0, acc_d, 0.2 * acc_d)            # LeakyReLU(0.2)
    x_enc = acc_d.reshape(Ho, Wo, Cm)                           # f32

    # ---- bilinear 2x upsample (align_corners=False), W-parity kept separated ----
    em1 = jnp.concatenate([x_enc[:1], x_enc[:-1]], axis=0)      # row i-1 (clamped)
    ep1 = jnp.concatenate([x_enc[1:], x_enc[-1:]], axis=0)      # row i+1 (clamped)
    xh_e = 0.25 * em1 + 0.75 * x_enc                            # upsampled rows 2i
    xh_o = 0.75 * x_enc + 0.25 * ep1                            # upsampled rows 2i+1
    xh = jnp.stack([xh_e, xh_o], axis=1).reshape(H, Wo, Cm)     # interleave rows (leading-dim reshape)

    wm1 = jnp.concatenate([xh[:, :1], xh[:, :-1]], axis=1)      # col j-1 (clamped)
    wp1 = jnp.concatenate([xh[:, 1:], xh[:, -1:]], axis=1)      # col j+1 (clamped)
    up_e = 0.25 * wm1 + 0.75 * xh                               # upsampled cols 2t
    up_o = 0.75 * xh + 0.25 * wp1                               # upsampled cols 2t+1

    # ---- reflection pad + 3x3 up conv as ONE im2col matmul (K = 12*Cm) ----------
    # W tap sources [up[2t-1], up[2t], up[2t+1], up[2t+2]]; boundary reflection of
    # the upsampled image coincides with clamping of the parity arrays.
    o_m1 = jnp.concatenate([up_o[:, :1], up_o[:, :-1]], axis=1)
    e_p1 = jnp.concatenate([up_e[:, 1:], up_e[:, -1:]], axis=1)
    s4 = jnp.concatenate([o_m1, up_e, up_o, e_p1], axis=-1)     # (H, Wo, 4*Cm)
    # H reflection pad: row -1 -> row 1, row H -> row H-2
    s4r = jnp.concatenate([s4[1:2], s4, s4[H - 2:H - 1]], axis=0)              # (H+2, Wo, 4*Cm)
    patch_u = jnp.concatenate([s4r[kh:kh + H] for kh in range(3)], axis=-1)    # (H, Wo, 12*Cm)
    acc_u = jnp.dot(patch_u.reshape(H * Wo, 12 * Cm).astype(jnp.bfloat16),
                    wu_ref[...], preferred_element_type=jnp.float32)
    acc_u = acc_u + bu_ref[...]
    acc_u = jnp.where(acc_u > 0, acc_u, 0.2 * acc_u)            # LeakyReLU(0.2)
    dec = acc_u.reshape(H, Wo, 2 * Cout)                        # [..., :Cout] even cols, rest odd

    # ---- skip concat, written directly in the W-parity-merged output layout -----
    out = jnp.concatenate([xm[:, :, :Cin],     # x,     even columns
                           dec[:, :, :Cout],   # x_dec, even columns
                           xm[:, :, Cin:],     # x,     odd columns
                           dec[:, :, Cout:]],  # x_dec, odd columns
                          axis=-1)             # (H, Wo, 2*(Cin+Cout))
    o_ref[0] = out.astype(o_ref.dtype)


# ----------------------------------------------------------------------------
# Wrapper: layout plumbing (free HBM reshapes) + one pallas_call
# ----------------------------------------------------------------------------
def unet_skip_concat_block_forward(x_nchw, params):
    """forward() of UnetSkipConnectionConcatBlock(innermost=True).  x: (N, Cin, H, W) f32."""
    N, Cin, H, W = x_nchw.shape
    assert H % 2 == 0 and W % 2 == 0 and H >= 4 and W >= 4, "even spatial dims >= 4 required"
    Wo = W // 2
    Cm = params['w_down'].shape[-1]
    Cout = params['w_up'].shape[-1]
    Ctot = Cin + Cout

    # NCHW -> NHWC (channels on lanes), then the *free* W-parity merge reshape.
    x = jnp.transpose(x_nchw, (0, 2, 3, 1))
    x_m = x.reshape(N, H, Wo, 2 * Cin)

    # Weight / bias rearrangement (tiny, trace-time).
    wd = params['w_down'].reshape(16 * Cin, Cm).astype(jnp.bfloat16)
    bd = params['b_down'].reshape(1, Cm).astype(jnp.float32)

    w_up = params['w_up']                                       # (3, 3, Cm, Cout) HWIO
    zero = jnp.zeros((3, Cm, Cout), w_up.dtype)
    # Up-conv column taps come from 4 W sources [up[2t-1], up[2t], up[2t+1], up[2t+2]];
    # even output columns use sources 0..2 (kw=0..2), odd ones use sources 1..3.
    w_even = jnp.stack([w_up[:, 0], w_up[:, 1], w_up[:, 2], zero], axis=1)     # (3, 4, Cm, Cout)
    w_odd = jnp.stack([zero, w_up[:, 0], w_up[:, 1], w_up[:, 2]], axis=1)
    wu = (jnp.concatenate([w_even, w_odd], axis=-1)
          .reshape(12 * Cm, 2 * Cout).astype(jnp.bfloat16))
    bu = jnp.concatenate([params['b_up'], params['b_up']]).reshape(1, 2 * Cout).astype(jnp.float32)

    out_m = pl.pallas_call(
        _unet_innermost_kernel,
        out_shape=jax.ShapeDtypeStruct((N, H, Wo, 2 * Ctot), jnp.float32),
        grid=(N,),
        in_specs=[
            pl.BlockSpec((1, H, Wo, 2 * Cin), lambda n: (n, 0, 0, 0)),
            pl.BlockSpec((16 * Cin, Cm), lambda n: (0, 0)),
            pl.BlockSpec((1, Cm), lambda n: (0, 0)),
            pl.BlockSpec((12 * Cm, 2 * Cout), lambda n: (0, 0)),
            pl.BlockSpec((1, 2 * Cout), lambda n: (0, 0)),
        ],
        out_specs=pl.BlockSpec((1, H, Wo, 2 * Ctot), lambda n: (n, 0, 0, 0)),
        compiler_params=pltpu.CompilerParams(
            dimension_semantics=("parallel",),
            vmem_limit_bytes=32 * 1024 * 1024,
        ),
    )(x_m, wd, bd, wu, bu)

    # Free un-merge of the W parity, then back to NCHW.
    out = out_m.reshape(N, H, W, Ctot)
    return jnp.transpose(out, (0, 3, 1, 2))


# ----------------------------------------------------------------------------
# Pure-JAX reference (lax.conv) used only for the correctness check
# ----------------------------------------------------------------------------
def _interp_matrix(size_in, size_out):
    # nn.Upsample(scale_factor=2, mode='bilinear'), align_corners=False
    i = jnp.arange(size_out, dtype=jnp.float32)
    pos = jnp.maximum((i + 0.5) * size_in / size_out - 0.5, 0.0)
    lo = jnp.minimum(jnp.floor(pos).astype(jnp.int32), size_in - 1)
    hi = jnp.minimum(lo + 1, size_in - 1)
    frac = pos - lo.astype(jnp.float32)
    return ((1.0 - frac)[:, None] * jax.nn.one_hot(lo, size_in)
            + frac[:, None] * jax.nn.one_hot(hi, size_in))


def bilinear_upsample_2x(x_nhwc):
    N, H, W, C = x_nhwc.shape
    Uh = _interp_matrix(H, 2 * H)
    Uw = _interp_matrix(W, 2 * W)
    y = jnp.einsum('oh,nhwc->nowc', Uh, x_nhwc)
    return jnp.einsum('pw,nowc->nopc', Uw, y)


def reference_forward(x_nchw, params):
    """Reference with matching bf16 matmul inputs / f32 accumulation."""
    x = jnp.transpose(x_nchw, (0, 2, 3, 1))
    y = jax.lax.conv_general_dilated(
        x.astype(jnp.bfloat16), params['w_down'].astype(jnp.bfloat16),
        (2, 2), ((1, 1), (1, 1)),
        dimension_numbers=('NHWC', 'HWIO', 'NHWC'),
        preferred_element_type=jnp.float32) + params['b_down']
    y = jnp.where(y > 0, y, 0.2 * y)
    u = bilinear_upsample_2x(y)
    u = jnp.pad(u, ((0, 0), (1, 1), (1, 1), (0, 0)), mode='reflect')
    z = jax.lax.conv_general_dilated(
        u.astype(jnp.bfloat16), params['w_up'].astype(jnp.bfloat16),
        (1, 1), 'VALID',
        dimension_numbers=('NHWC', 'HWIO', 'NHWC'),
        preferred_element_type=jnp.float32) + params['b_up']
    z = jnp.where(z > 0, z, 0.2 * z)
    out = jnp.concatenate([x, z], axis=-1)
    return jnp.transpose(out, (0, 3, 1, 2))


if __name__ == "__main__":
    # Small shapes: batch=2, outer_nc=input_nc=4, inner_nc=8, spatial=16
    N, outer_nc, inner_nc, H, W = 2, 4, 8, 16, 16
    input_nc = outer_nc

    key = jax.random.PRNGKey(0)
    k1, k2, k3, k4, k5 = jax.random.split(key, 5)
    params = dict(
        w_down=jax.random.normal(k1, (4, 4, input_nc, inner_nc), jnp.float32) * 0.1,
        b_down=jax.random.normal(k2, (inner_nc,), jnp.float32) * 0.1,
        w_up=jax.random.normal(k3, (3, 3, inner_nc, outer_nc), jnp.float32) * 0.1,
        b_up=jax.random.normal(k4, (outer_nc,), jnp.float32) * 0.1,
    )
    x = jax.random.normal(k5, (N, input_nc, H, W), jnp.float32)

    fwd = jax.jit(unet_skip_concat_block_forward)
    out = jax.block_until_ready(fwd(x, params))
    assert out.shape == (N, 2 * outer_nc, H, W), out.shape

    ref = jax.block_until_ready(reference_forward(x, params))
    np.testing.assert_allclose(np.asarray(out), np.asarray(ref), rtol=1e-2, atol=1e-2)

    print("KERNEL_OK")
</pallas_src>

<mosaic_0001>
module attributes {stable_mosaic.version = 11 : i64} {
  func.func @_unet_innermost_kernel(%arg0: i32, %arg1: memref<1x16x8x8xf32, #tpu.memory_space<vmem>>, %arg2: memref<64x8xbf16, #tpu.memory_space<vmem>>, %arg3: memref<1x8xf32, #tpu.memory_space<vmem>>, %arg4: memref<96x8xbf16, #tpu.memory_space<vmem>>, %arg5: memref<1x8xf32, #tpu.memory_space<vmem>>, %arg6: memref<1x16x8x16xf32, #tpu.memory_space<vmem>>) attributes {dimension_semantics = [#tpu.dimension_semantics<parallel>], iteration_bounds = array<i64: 2>, scalar_prefetch = 0 : i64, scratch_operands = 0 : i64, tpu.core_type = #tpu.core_type<tc>, window_params = [{transform_indices = @transform_0, window_bounds = array<i64: 1, 16, 8, 8>}, {pipeline_mode = #tpu.pipeline_mode<synchronous>, transform_indices = @transform_1, window_bounds = array<i64: 64, 8>}, {pipeline_mode = #tpu.pipeline_mode<synchronous>, transform_indices = @transform_2, window_bounds = array<i64: 1, 8>}, {pipeline_mode = #tpu.pipeline_mode<synchronous>, transform_indices = @transform_3, window_bounds = array<i64: 96, 8>}, {pipeline_mode = #tpu.pipeline_mode<synchronous>, transform_indices = @transform_4, window_bounds = array<i64: 1, 8>}, {transform_indices = @transform_5, window_bounds = array<i64: 1, 16, 8, 16>}]} {
    %c0 = arith.constant 0 : index
    %c0_0 = arith.constant 0 : index
    %c0_1 = arith.constant 0 : index
    %c0_2 = arith.constant 0 : index
    %0 = vector.load %arg1[%c0, %c0_0, %c0_1, %c0_2] : memref<1x16x8x8xf32, #tpu.memory_space<vmem>>, vector<1x16x8x8xf32>
    %1 = vector.shape_cast %0 : vector<1x16x8x8xf32> to vector<16x8x8xf32>
    %cst = arith.constant 0.000000e+00 : f32
    %2 = vector.broadcast %cst : f32 to vector<16x1x4xf32>
    %3 = vector.extract_strided_slice %1 {offsets = [0, 0, 4], sizes = [16, 8, 4], strides = [1, 1, 1]} : vector<16x8x8xf32> to vector<16x8x4xf32>
    %4 = tpu.concatenate %2, %3 in 1 : vector<16x1x4xf32>, vector<16x8x4xf32> -> vector<16x9x4xf32>
    %5 = vector.extract_strided_slice %1 {offsets = [0, 0, 0], sizes = [16, 8, 4], strides = [1, 1, 1]} : vector<16x8x8xf32> to vector<16x8x4xf32>
    %6 = tpu.concatenate %5, %2 in 1 : vector<16x8x4xf32>, vector<16x1x4xf32> -> vector<16x9x4xf32>
    %7 = tpu.concatenate %4, %6 in 2 : vector<16x9x4xf32>, vector<16x9x4xf32> -> vector<16x9x8xf32>
    %cst_3 = arith.constant 0.000000e+00 : f32
    %8 = vector.broadcast %cst_3 : f32 to vector<1x9x8xf32>
    %9 = tpu.concatenate %8, %7, %8 in 0 : vector<1x9x8xf32>, vector<16x9x8xf32>, vector<1x9x8xf32> -> vector<18x9x8xf32>
    %10 = vector.shape_cast %9 : vector<18x9x8xf32> to vector<9x2x9x8xf32>
    %11 = vector.extract_strided_slice %10 {offsets = [0, 0, 0, 0], sizes = [8, 1, 8, 8], strides = [1, 1, 1, 1]} : vector<9x2x9x8xf32> to vector<8x1x8x8xf32>
    %12 = vector.shape_cast %11 : vector<8x1x8x8xf32> to vector<8x8x8xf32>
    %13 = vector.extract_strided_slice %10 {offsets = [0, 0, 1, 0], sizes = [8, 1, 8, 8], strides = [1, 1, 1, 1]} : vector<9x2x9x8xf32> to vector<8x1x8x8xf32>
    %14 = vector.shape_cast %13 : vector<8x1x8x8xf32> to vector<8x8x8xf32>
    %15 = vector.extract_strided_slice %10 {offsets = [0, 1, 0, 0], sizes = [8, 1, 8, 8], strides = [1, 1, 1, 1]} : vector<9x2x9x8xf32> to vector<8x1x8x8xf32>
    %16 = vector.shape_cast %15 : vector<8x1x8x8xf32> to vector<8x8x8xf32>
    %17 = vector.extract_strided_slice %10 {offsets = [0, 1, 1, 0], sizes = [8, 1, 8, 8], strides = [1, 1, 1, 1]} : vector<9x2x9x8xf32> to vector<8x1x8x8xf32>
    %18 = vector.shape_cast %17 : vector<8x1x8x8xf32> to vector<8x8x8xf32>
    %19 = vector.extract_strided_slice %10 {offsets = [1, 0, 0, 0], sizes = [8, 1, 8, 8], strides = [1, 1, 1, 1]} : vector<9x2x9x8xf32> to vector<8x1x8x8xf32>
    %20 = vector.shape_cast %19 : vector<8x1x8x8xf32> to vector<8x8x8xf32>
    %21 = vector.extract_strided_slice %10 {offsets = [1, 0, 1, 0], sizes = [8, 1, 8, 8], strides = [1, 1, 1, 1]} : vector<9x2x9x8xf32> to vector<8x1x8x8xf32>
    %22 = vector.shape_cast %21 : vector<8x1x8x8xf32> to vector<8x8x8xf32>
    %23 = vector.extract_strided_slice %10 {offsets = [1, 1, 0, 0], sizes = [8, 1, 8, 8], strides = [1, 1, 1, 1]} : vector<9x2x9x8xf32> to vector<8x1x8x8xf32>
    %24 = vector.shape_cast %23 : vector<8x1x8x8xf32> to vector<8x8x8xf32>
    %25 = vector.extract_strided_slice %10 {offsets = [1, 1, 1, 0], sizes = [8, 1, 8, 8], strides = [1, 1, 1, 1]} : vector<9x2x9x8xf32> to vector<8x1x8x8xf32>
    %26 = vector.shape_cast %25 : vector<8x1x8x8xf32> to vector<8x8x8xf32>
    %27 = tpu.concatenate %12, %14, %16, %18, %20, %22, %24, %26 in 2 : vector<8x8x8xf32>, vector<8x8x8xf32>, vector<8x8x8xf32>, vector<8x8x8xf32>, vector<8x8x8xf32>, vector<8x8x8xf32>, vector<8x8x8xf32>, vector<8x8x8xf32> -> vector<8x8x64xf32>
    %28 = vector.shape_cast %27 : vector<8x8x64xf32> to vector<64x64xf32>
    %29 = arith.truncf %28 : vector<64x64xf32> to vector<64x64xbf16>
    %c0_4 = arith.constant 0 : index
    %c0_5 = arith.constant 0 : index
    %30 = vector.load %arg2[%c0_4, %c0_5] : memref<64x8xbf16, #tpu.memory_space<vmem>>, vector<64x8xbf16>
    %cst_6 = arith.constant dense<0.000000e+00> : vector<64x8xf32>
    %31 = tpu.matmul %29, %30, %cst_6 {dimension_numbers = #tpu.dot_dimension_numbers<[1], [0], [0], [1], [0, 0, 1, 1], [], []>} : vector<64x64xbf16>, vector<64x8xbf16>, vector<64x8xf32> -> vector<64x8xf32>
    %c0_7 = arith.constant 0 : index
    %c0_8 = arith.constant 0 : index
    %32 = vector.load %arg3[%c0_7, %c0_8] : memref<1x8xf32, #tpu.memory_space<vmem>>, vector<1x8xf32>
    %33 = vector.broadcast %32 : vector<1x8xf32> to vector<64x8xf32>
    %34 = arith.addf %31, %33 : vector<64x8xf32>
    %cst_9 = arith.constant 0.000000e+00 : f32
    %35 = vector.broadcast %cst_9 : f32 to vector<64x8xf32>
    %36 = arith.cmpf ogt, %34, %35 : vector<64x8xf32>
    %cst_10 = arith.constant 2.000000e-01 : f32
    %37 = vector.broadcast %cst_10 : f32 to vector<64x8xf32>
    %38 = arith.mulf %37, %34 : vector<64x8xf32>
    %39 = arith.select %36, %34, %38 : vector<64x8xi1>, vector<64x8xf32>
    %40 = vector.shape_cast %39 : vector<64x8xf32> to vector<8x8x8xf32>
    %41 = vector.extract_strided_slice %40 {offsets = [0, 0, 0], sizes = [1, 8, 8], strides = [1, 1, 1]} : vector<8x8x8xf32> to vector<1x8x8xf32>
    %42 = vector.extract_strided_slice %40 {offsets = [0, 0, 0], sizes = [7, 8, 8], strides = [1, 1, 1]} : vector<8x8x8xf32> to vector<7x8x8xf32>
    %43 = tpu.concatenate %41, %42 in 0 : vector<1x8x8xf32>, vector<7x8x8xf32> -> vector<8x8x8xf32>
    %44 = vector.extract_strided_slice %40 {offsets = [1, 0, 0], sizes = [7, 8, 8], strides = [1, 1, 1]} : vector<8x8x8xf32> to vector<7x8x8xf32>
    %45 = vector.extract_strided_slice %40 {offsets = [7, 0, 0], sizes = [1, 8, 8], strides = [1, 1, 1]} : vector<8x8x8xf32> to vector<1x8x8xf32>
    %46 = tpu.concatenate %44, %45 in 0 : vector<7x8x8xf32>, vector<1x8x8xf32> -> vector<8x8x8xf32>
    %cst_11 = arith.constant 2.500000e-01 : f32
    %47 = vector.broadcast %cst_11 : f32 to vector<8x8x8xf32>
    %48 = arith.mulf %47, %43 : vector<8x8x8xf32>
    %cst_12 = arith.constant 7.500000e-01 : f32
    %49 = vector.broadcast %cst_12 : f32 to vector<8x8x8xf32>
    %50 = arith.mulf %49, %40 : vector<8x8x8xf32>
    %51 = arith.addf %48, %50 : vector<8x8x8xf32>
    %cst_13 = arith.constant 7.500000e-01 : f32
    %52 = vector.broadcast %cst_13 : f32 to vector<8x8x8xf32>
    %53 = arith.mulf %52, %40 : vector<8x8x8xf32>
    %cst_14 = arith.constant 2.500000e-01 : f32
    %54 = vector.broadcast %cst_14 : f32 to vector<8x8x8xf32>
    %55 = arith.mulf %54, %46 : vector<8x8x8xf32>
    %56 = arith.addf %53, %55 : vector<8x8x8xf32>
    %57 = vector.shape_cast %51 : vector<8x8x8xf32> to vector<8x1x8x8xf32>
    %58 = vector.shape_cast %56 : vector<8x8x8xf32> to vector<8x1x8x8xf32>
    %59 = tpu.concatenate %57, %58 in 1 : vector<8x1x8x8xf32>, vector<8x1x8x8xf32> -> vector<8x2x8x8xf32>
    %60 = vector.shape_cast %59 : vector<8x2x8x8xf32> to vector<16x8x8xf32>
    %61 = vector.extract_strided_slice %60 {offsets = [0, 0, 0], sizes = [16, 1, 8], strides = [1, 1, 1]} : vector<16x8x8xf32> to vector<16x1x8xf32>
    %62 = vector.extract_strided_slice %60 {offsets = [0, 0, 0], sizes = [16, 7, 8], strides = [1, 1, 1]} : vector<16x8x8xf32> to vector<16x7x8xf32>
    %63 = tpu.concatenate %61, %62 in 1 : vector<16x1x8xf32>, vector<16x7x8xf32> -> vector<16x8x8xf32>
    %64 = vector.extract_strided_slice %60 {offsets = [0, 1, 0], sizes = [16, 7, 8], strides = [1, 1, 1]} : vector<16x8x8xf32> to vector<16x7x8xf32>
    %65 = vector.extract_strided_slice %60 {offsets = [0, 7, 0], sizes = [16, 1, 8], strides = [1, 1, 1]} : vector<16x8x8xf32> to vector<16x1x8xf32>
    %66 = tpu.concatenate %64, %65 in 1 : vector<16x7x8xf32>, vector<16x1x8xf32> -> vector<16x8x8xf32>
    %cst_15 = arith.constant 2.500000e-01 : f32
    %67 = vector.broadcast %cst_15 : f32 to vector<16x8x8xf32>
    %68 = arith.mulf %67, %63 : vector<16x8x8xf32>
    %cst_16 = arith.constant 7.500000e-01 : f32
    %69 = vector.broadcast %cst_16 : f32 to vector<16x8x8xf32>
    %70 = arith.mulf %69, %60 : vector<16x8x8xf32>
    %71 = arith.addf %68, %70 : vector<16x8x8xf32>
    %cst_17 = arith.constant 7.500000e-01 : f32
    %72 = vector.broadcast %cst_17 : f32 to vector<16x8x8xf32>
    %73 = arith.mulf %72, %60 : vector<16x8x8xf32>
    %cst_18 = arith.constant 2.500000e-01 : f32
    %74 = vector.broadcast %cst_18 : f32 to vector<16x8x8xf32>
    %75 = arith.mulf %74, %66 : vector<16x8x8xf32>
    %76 = arith.addf %73, %75 : vector<16x8x8xf32>
    %77 = vector.extract_strided_slice %76 {offsets = [0, 0, 0], sizes = [16, 1, 8], strides = [1, 1, 1]} : vector<16x8x8xf32> to vector<16x1x8xf32>
    %78 = vector.extract_strided_slice %76 {offsets = [0, 0, 0], sizes = [16, 7, 8], strides = [1, 1, 1]} : vector<16x8x8xf32> to vector<16x7x8xf32>
    %79 = tpu.concatenate %77, %78 in 1 : vector<16x1x8xf32>, vector<16x7x8xf32> -> vector<16x8x8xf32>
    %80 = vector.extract_strided_slice %71 {offsets = [0, 1, 0], sizes = [16, 7, 8], strides = [1, 1, 1]} : vector<16x8x8xf32> to vector<16x7x8xf32>
    %81 = vector.extract_strided_slice %71 {offsets = [0, 7, 0], sizes = [16, 1, 8], strides = [1, 1, 1]} : vector<16x8x8xf32> to vector<16x1x8xf32>
    %82 = tpu.concatenate %80, %81 in 1 : vector<16x7x8xf32>, vector<16x1x8xf32> -> vector<16x8x8xf32>
    %83 = tpu.concatenate %79, %71, %76, %82 in 2 : vector<16x8x8xf32>, vector<16x8x8xf32>, vector<16x8x8xf32>, vector<16x8x8xf32> -> vector<16x8x32xf32>
    %84 = vector.extract_strided_slice %83 {offsets = [1, 0, 0], sizes = [1, 8, 32], strides = [1, 1, 1]} : vector<16x8x32xf32> to vector<1x8x32xf32>
    %85 = vector.extract_strided_slice %83 {offsets = [14, 0, 0], sizes = [1, 8, 32], strides = [1, 1, 1]} : vector<16x8x32xf32> to vector<1x8x32xf32>
    %86 = tpu.concatenate %84, %83, %85 in 0 : vector<1x8x32xf32>, vector<16x8x32xf32>, vector<1x8x32xf32> -> vector<18x8x32xf32>
    %87 = vector.extract_strided_slice %86 {offsets = [0, 0, 0], sizes = [16, 8, 32], strides = [1, 1, 1]} : vector<18x8x32xf32> to vector<16x8x32xf32>
    %88 = vector.extract_strided_slice %86 {offsets = [1, 0, 0], sizes = [16, 8, 32], strides = [1, 1, 1]} : vector<18x8x32xf32> to vector<16x8x32xf32>
    %89 = vector.extract_strided_slice %86 {offsets = [2, 0, 0], sizes = [16, 8, 32], strides = [1, 1, 1]} : vector<18x8x32xf32> to vector<16x8x32xf32>
    %90 = tpu.concatenate %87, %88, %89 in 2 : vector<16x8x32xf32>, vector<16x8x32xf32>, vector<16x8x32xf32> -> vector<16x8x96xf32>
    %91 = vector.shape_cast %90 : vector<16x8x96xf32> to vector<128x96xf32>
    %92 = arith.truncf %91 : vector<128x96xf32> to vector<128x96xbf16>
    %c0_19 = arith.constant 0 : index
    %c0_20 = arith.constant 0 : index
    %93 = vector.load %arg4[%c0_19, %c0_20] : memref<96x8xbf16, #tpu.memory_space<vmem>>, vector<96x8xbf16>
    %cst_21 = arith.constant dense<0.000000e+00> : vector<128x8xf32>
    %94 = tpu.matmul %92, %93, %cst_21 {dimension_numbers = #tpu.dot_dimension_numbers<[1], [0], [0], [1], [0, 0, 1, 1], [], []>} : vector<128x96xbf16>, vector<96x8xbf16>, vector<128x8xf32> -> vector<128x8xf32>
    %c0_22 = arith.constant 0 : index
    %c0_23 = arith.constant 0 : index
    %95 = vector.load %arg5[%c0_22, %c0_23] : memref<1x8xf32, #tpu.memory_space<vmem>>, vector<1x8xf32>
    %96 = vector.broadcast %95 : vector<1x8xf32> to vector<128x8xf32>
    %97 = arith.addf %94, %96 : vector<128x8xf32>
    %cst_24 = arith.constant 0.000000e+00 : f32
    %98 = vector.broadcast %cst_24 : f32 to vector<128x8xf32>
    %99 = arith.cmpf ogt, %97, %98 : vector<128x8xf32>
    %cst_25 = arith.constant 2.000000e-01 : f32
    %100 = vector.broadcast %cst_25 : f32 to vector<128x8xf32>
    %101 = arith.mulf %100, %97 : vector<128x8xf32>
    %102 = arith.select %99, %97, %101 : vector<128x8xi1>, vector<128x8xf32>
    %103 = vector.shape_cast %102 : vector<128x8xf32> to vector<16x8x8xf32>
    %104 = vector.extract_strided_slice %1 {offsets = [0, 0, 0], sizes = [16, 8, 4], strides = [1, 1, 1]} : vector<16x8x8xf32> to vector<16x8x4xf32>
    %105 = vector.extract_strided_slice %103 {offsets = [0, 0, 0], sizes = [16, 8, 4], strides = [1, 1, 1]} : vector<16x8x8xf32> to vector<16x8x4xf32>
    %106 = vector.extract_strided_slice %1 {offsets = [0, 0, 4], sizes = [16, 8, 4], strides = [1, 1, 1]} : vector<16x8x8xf32> to vector<16x8x4xf32>
    %107 = vector.extract_strided_slice %103 {offsets = [0, 0, 4], sizes = [16, 8, 4], strides = [1, 1, 1]} : vector<16x8x8xf32> to vector<16x8x4xf32>
    %108 = tpu.concatenate %104, %105, %106, %107 in 2 : vector<16x8x4xf32>, vector<16x8x4xf32>, vector<16x8x4xf32>, vector<16x8x4xf32> -> vector<16x8x16xf32>
    %c0_26 = arith.constant 0 : index
    %c0_27 = arith.constant 0 : index
    %c0_28 = arith.constant 0 : index
    %c0_29 = arith.constant 0 : index
    %109 = vector.load %arg6[%c0_26, %c0_27, %c0_28, %c0_29] : memref<1x16x8x16xf32, #tpu.memory_space<vmem>>, vector<1x16x8x16xf32>
    %110 = vector.shape_cast %109 : vector<1x16x8x16xf32> to vector<16x8x16xf32>
    %111 = vector.shape_cast %108 : vector<16x8x16xf32> to vector<1x16x8x16xf32>
    tpu.vector_store %arg6[%c0_26, %c0_27, %c0_28, %c0_29], %111 {strides = array<i32>} : memref<1x16x8x16xf32, #tpu.memory_space<vmem>>, vector<1x16x8x16xf32>,
    return
  }
  func.func @transform_0(%arg0: i32) -> (i32, i32, i32, i32) {
    %c0_i32 = arith.constant 0 : i32
    %c0_i32_0 = arith.constant 0 : i32
    %c0_i32_1 = arith.constant 0 : i32
    %c0_i32_2 = arith.constant 0 : i32
    return %arg0, %c0_i32, %c0_i32_0, %c0_i32_1 : i32, i32, i32, i32
  }
  func.func @transform_1(%arg0: i32) -> (i32, i32) {
    %c0_i32 = arith.constant 0 : i32
    %c0_i32_0 = arith.constant 0 : i32
    %c0_i32_1 = arith.constant 0 : i32
    return %c0_i32, %c0_i32_0 : i32, i32
  }
  func.func @transform_2(%arg0: i32) -> (i32, i32) {
    %c0_i32 = arith.constant 0 : i32
    %c0_i32_0 = arith.constant 0 : i32
    %c0_i32_1 = arith.constant 0 : i32
    return %c0_i32, %c0_i32_0 : i32, i32
  }
  func.func @transform_3(%arg0: i32) -> (i32, i32) {
    %c0_i32 = arith.constant 0 : i32
    %c0_i32_0 = arith.constant 0 : i32
    %c0_i32_1 = arith.constant 0 : i32
    return %c0_i32, %c0_i32_0 : i32, i32
  }
  func.func @transform_4(%arg0: i32) -> (i32, i32) {
    %c0_i32 = arith.constant 0 : i32
    %c0_i32_0 = arith.constant 0 : i32
    %c0_i32_1 = arith.constant 0 : i32
    return %c0_i32, %c0_i32_0 : i32, i32
  }
  func.func @transform_5(%arg0: i32) -> (i32, i32, i32, i32) {
    %c0_i32 = arith.constant 0 : i32
    %c0_i32_0 = arith.constant 0 : i32
    %c0_i32_1 = arith.constant 0 : i32
    %c0_i32_2 = arith.constant 0 : i32
    return %arg0, %c0_i32, %c0_i32_0, %c0_i32_1 : i32, i32, i32, i32
  }
}

</mosaic_0001>

<llo_original>
// kernel: unet_skip_concat_block_forward.1
$region0: #{unet_skip_concat_block_forward.1}
  #allocation0 [shape = 'u32[]', space=smem, size = 0x4, offset = 0x4, fixed_abs, tag = 'smem constant byte address 0x4 - core index']
  #allocation1 [shape = 'u32[144,128]{1,0:T(1,128)}', space=vmem, size = 0x12000, scoped, tag = 'internal scratch']
  %s0 = inlined_call_operand.vmem [shape: f32[2,16,8,8], index: 0, kind: input, shape index: {}]
  %s1 = inlined_call_operand.vmem [shape: bf16[64,8], index: 1, kind: input, shape index: {}]
  %s2 = inlined_call_operand.vmem [shape: f32[1,8], index: 2, kind: input, shape index: {}]
  %s3 = inlined_call_operand.vmem [shape: bf16[96,8], index: 3, kind: input, shape index: {}]
  %s4 = inlined_call_operand.vmem [shape: f32[1,8], index: 4, kind: input, shape index: {}]
  %s5 = inlined_call_operand.vmem [shape: f32[2,16,8,16], index: 5, kind: output, shape index: {}]
  %s6 = sld [smem:[#allocation0]]
  $region53: #{unet_skip_concat_block_forward.1} parent=0
    _
  %s8 = ssub.s32 1, %s6
  %s9 = scalar_select 0, %s8, %s6
  loop: start=0, step=1, limit=4
  $region2: #{unet_skip_concat_block_forward.1} parent=0 // loop_pre_header
    _
  $region3: #{unet_skip_concat_block_forward.1} parent=0 // loop_header
    %s11 = sphi 0, %s15
    %p12 = scmp.ge.s32.totalorder %s11, 4
    %s21 = sphi 0, %s23
    %s24 = sphi 0, %s21
    %s25 = sphi 0, %s24
    %s41 = sphi 0, %s25
    %s45 = sphi 0, %s45
    %s47 = sphi 0, %s45
    %s48 = sphi 0, %s47
    %s62 = sphi 0, %s48
    %s66 = sphi 0, %s66
    %s68 = sphi 0, %s66
    %s69 = sphi 0, %s68
    %s83 = sphi 0, %s69
    %s87 = sphi 0, %s87
    %s89 = sphi 0, %s87
    %s90 = sphi 0, %s89
    %s104 = sphi 0, %s90
    %s108 = sphi 0, %s108
    %s110 = sphi 0, %s108
    %s111 = sphi 0, %s110
    %s125 = sphi 0, %s111
    %s131 = sphi 0, %s133
    %s134 = sphi 0, %s131
    %s135 = sphi 0, %s134
    %s151 = sphi 0, %s135
  $region4: #{unet_skip_concat_block_forward.1} parent=0 // loop_header_branch
    %14 = sbr.rel (%p12) target = $region8
  $region5: #{unet_skip_concat_block_forward.1} parent=0 // loop_body
    %s16 = ssub.s32 %s11, 1
    %s17 = ssub.s32 %s11, 2
    %s18 = sadd.s32 %s11, 1
    %s19 = ssub.s32 %s11, %s18
    %p20 = scmp.eq.s32.totalorder %s19, 0
    %s22 = sadd.s32 %s21, 1
    %s23 = scalar_select %p20, %s21, %s22
    %p26 = pneg %p20
    %p27 = scmp.eq.s32.totalorder %s11, 1
    %p28 = por %p26, %p27
    %p29 = scmp.ne.s32.totalorder %s21, %s24
    %p30 = scmp.eq.s32.totalorder %s11, 0
    %p31 = por %p29, %p30
    %p32 = scmp.ne.s32.totalorder %s21, %s24
    %p33 = scmp.eq.s32.totalorder %s16, 1
    %p34 = por %p32, %p33
    %p35 = scmp.ne.s32.totalorder %s24, %s25
    %p36 = scmp.eq.s32.totalorder %s16, 0
    %p37 = por %p35, %p36
    %p38 = scmp.ne.s32.totalorder %s24, %s25
    %p39 = scmp.eq.s32.totalorder %s17, 1
    %p40 = por %p38, %p39
    %p42 = scmp.ne.s32.totalorder %s25, %s41
    %p43 = scmp.eq.s32.totalorder %s17, 0
    %p44 = por %p42, %p43
    %s46 = sadd.s32 %s45, 1
    %p49 = scmp.eq.s32.totalorder %s11, 1
    %p50 = scmp.ne.s32.totalorder %s45, %s47
    %p51 = scmp.eq.s32.totalorder %s11, 0
    %p52 = por %p50, %p51
    %p53 = scmp.ne.s32.totalorder %s45, %s47
    %p54 = scmp.eq.s32.totalorder %s16, 1
    %p55 = por %p53, %p54
    %p56 = scmp.ne.s32.totalorder %s47, %s48
    %p57 = scmp.eq.s32.totalorder %s16, 0
    %p58 = por %p56, %p57
    %p59 = scmp.ne.s32.totalorder %s47, %s48
    %p60 = scmp.eq.s32.totalorder %s17, 1
    %p61 = por %p59, %p60
    %p63 = scmp.ne.s32.totalorder %s48, %s62
    %p64 = scmp.eq.s32.totalorder %s17, 0
    %p65 = por %p63, %p64
    %s67 = sadd.s32 %s66, 1
    %p70 = scmp.eq.s32.totalorder %s11, 1
    %p71 = scmp.ne.s32.totalorder %s66, %s68
    %p72 = scmp.eq.s32.totalorder %s11, 0
    %p73 = por %p71, %p72
    %p74 = scmp.ne.s32.totalorder %s66, %s68
    %p75 = scmp.eq.s32.totalorder %s16, 1
    %p76 = por %p74, %p75
    %p77 = scmp.ne.s32.totalorder %s68, %s69
    %p78 = scmp.eq.s32.totalorder %s16, 0
    %p79 = por %p77, %p78
    %p80 = scmp.ne.s32.totalorder %s68, %s69
    %p81 = scmp.eq.s32.totalorder %s17, 1
    %p82 = por %p80, %p81
    %p84 = scmp.ne.s32.totalorder %s69, %s83
    %p85 = scmp.eq.s32.totalorder %s17, 0
    %p86 = por %p84, %p85
    %s88 = sadd.s32 %s87, 1
    %p91 = scmp.eq.s32.totalorder %s11, 1
    %p92 = scmp.ne.s32.totalorder %s87, %s89
    %p93 = scmp.eq.s32.totalorder %s11, 0
    %p94 = por %p92, %p93
    %p95 = scmp.ne.s32.totalorder %s87, %s89
    %p96 = scmp.eq.s32.totalorder %s16, 1
    %p97 = por %p95, %p96
    %p98 = scmp.ne.s32.totalorder %s89, %s90
    %p99 = scmp.eq.s32.totalorder %s16, 0
    %p100 = por %p98, %p99
    %p101 = scmp.ne.s32.totalorder %s89, %s90
    %p102 = scmp.eq.s32.totalorder %s17, 1
    %p103 = por %p101, %p102
    %p105 = scmp.ne.s32.totalorder %s90, %s104
    %p106 = scmp.eq.s32.totalorder %s17, 0
    %p107 = por %p105, %p106
    %s109 = sadd.s32 %s108, 1
    %p112 = scmp.eq.s32.totalorder %s11, 1
    %p113 = scmp.ne.s32.totalorder %s108, %s110
    %p114 = scmp.eq.s32.totalorder %s11, 0
    %p115 = por %p113, %p114
    %p116 = scmp.ne.s32.totalorder %s108, %s110
    %p117 = scmp.eq.s32.totalorder %s16, 1
    %p118 = por %p116, %p117
    %p119 = scmp.ne.s32.totalorder %s110, %s111
    %p120 = scmp.eq.s32.totalorder %s16, 0
    %p121 = por %p119, %p120
    %p122 = scmp.ne.s32.totalorder %s110, %s111
    %p123 = scmp.eq.s32.totalorder %s17, 1
    %p124 = por %p122, %p123
    %p126 = scmp.ne.s32.totalorder %s111, %s125
    %p127 = scmp.eq.s32.totalorder %s17, 0
    %p128 = por %p126, %p127
    %s129 = ssub.s32 %s11, %s18
    %p130 = scmp.eq.s32.totalorder %s129, 0
    %s132 = sadd.s32 %s131, 1
    %s133 = scalar_select %p130, %s131, %s132
    %p136 = pneg %p130
    %p137 = scmp.eq.s32.totalorder %s11, 1
    %p138 = por %p136, %p137
    %p139 = scmp.ne.s32.totalorder %s131, %s134
    %p140 = scmp.eq.s32.totalorder %s11, 0
    %p141 = por %p139, %p140
    %p142 = scmp.ne.s32.totalorder %s131, %s134
    %p143 = scmp.eq.s32.totalorder %s16, 1
    %p144 = por %p142, %p143
    %p145 = scmp.ne.s32.totalorder %s134, %s135
    %p146 = scmp.eq.s32.totalorder %s16, 0
    %p147 = por %p145, %p146
    %p148 = scmp.ne.s32.totalorder %s134, %s135
    %p149 = scmp.eq.s32.totalorder %s17, 1
    %p150 = por %p148, %p149
    %p152 = scmp.ne.s32.totalorder %s135, %s151
    %p153 = scmp.eq.s32.totalorder %s17, 0
    %p154 = por %p152, %p153
    %p155 = scmp.le.s32.totalorder 1, %s11
    %p156 = scmp.lt.s32.totalorder %s11, 3
    %p157 = pnand %p155, %p156
    %p158 = pneg %p157
    // Predicated region
    $region9: #{unet_skip_concat_block_forward.1} parent=5 // pred_check
      _
    $region10: #{unet_skip_concat_block_forward.1} parent=5 // pred_check_branch
      %160 = sbr.rel (%p157) target = $region12
    $region11: #{unet_skip_concat_block_forward.1} parent=5 // pred_region
      %s161 = ssub.s32 %s11, 1
      // Predicated region
      $region13: #{unet_skip_concat_block_forward.1} parent=11 // pred_check
        %p162 = pneg %p58
      $region14: #{unet_skip_concat_block_forward.1} parent=11 // pred_check_branch
        %164 = sbr.rel (%p162) target = $region16
      $region15: #{unet_skip_concat_block_forward.1} parent=11 // pred_region
        _
      $region16: #{unet_skip_concat_block_forward.1} parent=11 // pred_fallthru
        _
      // Predicated region
      $region17: #{unet_skip_concat_block_forward.1} parent=11 // pred_check
        %p165 = pneg %p79
      $region18: #{unet_skip_concat_block_forward.1} parent=11 // pred_check_branch
        %167 = sbr.rel (%p165) target = $region20
      $region19: #{unet_skip_concat_block_forward.1} parent=11 // pred_region
        _
      $region20: #{unet_skip_concat_block_forward.1} parent=11 // pred_fallthru
        _
      // Predicated region
      $region21: #{unet_skip_concat_block_forward.1} parent=11 // pred_check
        %p168 = pneg %p100
      $region22: #{unet_skip_concat_block_forward.1} parent=11 // pred_check_branch
        %170 = sbr.rel (%p168) target = $region24
      $region23: #{unet_skip_concat_block_forward.1} parent=11 // pred_region
        _
      $region24: #{unet_skip_concat_block_forward.1} parent=11 // pred_fallthru
        _
      // Predicated region
      $region25: #{unet_skip_concat_block_forward.1} parent=11 // pred_check
        %p171 = pneg %p121
      $region26: #{unet_skip_concat_block_forward.1} parent=11 // pred_check_branch
        %173 = sbr.rel (%p171) target = $region28
      $region27: #{unet_skip_concat_block_forward.1} parent=11 // pred_region
        _
      $region28: #{unet_skip_concat_block_forward.1} parent=11 // pred_fallthru
        _
    $region12: #{unet_skip_concat_block_forward.1} parent=5 // pred_fallthru
      _
    %p174 = scmp.lt.s32.totalorder %s11, 2
    // Predicated region
    $region29: #{unet_skip_concat_block_forward.1} parent=5 // pred_check
      %p175 = pneg %p174
    $region30: #{unet_skip_concat_block_forward.1} parent=5 // pred_check_branch
      %177 = sbr.rel (%p175) target = $region32
    $region31: #{unet_skip_concat_block_forward.1} parent=5 // pred_region
      // Predicated region
      $region33: #{unet_skip_concat_block_forward.1} parent=31 // pred_check
        %p178 = pneg %p31
      $region34: #{unet_skip_concat_block_forward.1} parent=31 // pred_check_branch
        %180 = sbr.rel (%p178) target = $region36
      $region35: #{unet_skip_concat_block_forward.1} parent=31 // pred_region
        %p181 = scmp.lt.s32.totalorder %s11, 1
        %s182 = scalar_select %p181, %s11, 1
        %s183 = smul.addr %s182, 16
        %s184 = smul.addr %s183, 8
        %s185 = scalar_lea.vmem %s0, %s184
      $region36: #{unet_skip_concat_block_forward.1} parent=31 // pred_fallthru
        _
    $region32: #{unet_skip_concat_block_forward.1} parent=5 // pred_fallthru
      _
    %p186 = scmp.le.s32.totalorder 1, %s11
    %p187 = scmp.lt.s32.totalorder %s11, 3
    %p188 = pnand %p186, %p187
    %p189 = pneg %p188
    // Predicated region
    $region37: #{unet_skip_concat_block_forward.1} parent=5 // pred_check
      _
    $region38: #{unet_skip_concat_block_forward.1} parent=5 // pred_check_branch
      %191 = sbr.rel (%p188) target = $region40
    $region39: #{unet_skip_concat_block_forward.1} parent=5 // pred_region
      %s192 = ssub.s32 %s11, 1
      %p193 = scmp.lt.s32.totalorder %s16, 1
      %s194 = scalar_select %p193, %s16, 1
      %s195 = smul.addr %s194, 16
      %s196 = smul.addr %s195, 8
      %s197 = scalar_lea.vmem %s0, %s196
      %p198 = pneg %p37
      %p199 = pneg %p34
      %p200 = pneg %p58
      %p201 = pneg %p55
      %p202 = pneg %p79
      %p203 = pneg %p76
      %p204 = pneg %p100
      %p205 = pneg %p97
      %p206 = pneg %p121
      %p207 = pneg %p118
      %p208 = pneg %p147
      %p209 = pneg %p144
      %p210 = scmp.lt.s32.totalorder %s16, 1
      %s211 = scalar_select %p210, %s16, 1
      %s212 = smul.addr %s211, 16
      %s213 = smul.addr %s212, 8
      %s214 = scalar_lea.vmem %s5, %s213
      %p215 = scmp.lt.s32.totalorder %s16, 1
      %s216 = scalar_select %p215, %s16, 1
      %s217 = smul.addr %s216, 16
      %s218 = smul.addr %s217, 8
      %s219 = scalar_lea.vmem %s0, %s218
      %p220 = scmp.lt.s32.totalorder %s16, 1
      %s221 = scalar_select %p220, %s16, 1
      %s222 = smul.addr %s221, 16
      %s223 = smul.addr %s222, 8
      %s224 = scalar_lea.vmem %s5, %s223
      %v226 = vld [vmem:[%s219] sm:$0xff]
      %v227 = vld [vmem:[%s219 + $0x8] sm:$0xff]
      %v228 = vld [vmem:[%s219 + $0x10] sm:$0xff]
      %v229 = vld [vmem:[%s219 + $0x18] sm:$0xff]
      %v230 = vld [vmem:[%s219 + $0x20] sm:$0xff]
      %v231 = vld [vmem:[%s219 + $0x28] sm:$0xff]
      %v232 = vld [vmem:[%s219 + $0x30] sm:$0xff]
      %v233 = vld [vmem:[%s219 + $0x38] sm:$0xff]
      %v234 = vld [vmem:[%s219 + $0x40] sm:$0xff]
      %v235 = vld [vmem:[%s219 + $0x48] sm:$0xff]
      %v236 = vld [vmem:[%s219 + $0x50] sm:$0xff]
      %v237 = vld [vmem:[%s219 + $0x58] sm:$0xff]
      %v238 = vld [vmem:[%s219 + $0x60] sm:$0xff]
      %v239 = vld [vmem:[%s219 + $0x68] sm:$0xff]
      %v240 = vld [vmem:[%s219 + $0x70] sm:$0xff]
      %v241 = vld [vmem:[%s219 + $0x78] sm:$0xff]
      %v258 = vrot.slane %v226, 7
      %v259 = vrot.slane %v227, 7
      %v260 = vrot.slane %v228, 7
      %v261 = vrot.slane %v229, 7
      %v262 = vrot.slane %v230, 7
      %v263 = vrot.slane %v231, 7
      %v264 = vrot.slane %v232, 7
      %v265 = vrot.slane %v233, 7
      %v266 = vrot.slane %v234, 7
      %v267 = vrot.slane %v235, 7
      %v268 = vrot.slane %v236, 7
      %v269 = vrot.slane %v237, 7
      %v270 = vrot.slane %v238, 7
      %v271 = vrot.slane %v239, 7
      %v272 = vrot.slane %v240, 7
      %v273 = vrot.slane %v241, 7
      %274 = vrot.lane.b32.xlu0 %v258, 124
      %v275 = vpop.permute.xlu0 %274
      %276 = vrot.lane.b32.xlu0 %v259, 124
      %v277 = vpop.permute.xlu0 %276
      %278 = vrot.lane.b32.xlu0 %v260, 124
      %v279 = vpop.permute.xlu0 %278
      %280 = vrot.lane.b32.xlu0 %v261, 124
      %v281 = vpop.permute.xlu0 %280
      %282 = vrot.lane.b32.xlu0 %v262, 124
      %v283 = vpop.permute.xlu0 %282
      %284 = vrot.lane.b32.xlu0 %v263, 124
      %v285 = vpop.permute.xlu0 %284
      %286 = vrot.lane.b32.xlu0 %v264, 124
      %v287 = vpop.permute.xlu0 %286
      %288 = vrot.lane.b32.xlu0 %v265, 124
      %v289 = vpop.permute.xlu0 %288
      %290 = vrot.lane.b32.xlu0 %v266, 124
      %v291 = vpop.permute.xlu0 %290
      %292 = vrot.lane.b32.xlu0 %v267, 124
      %v293 = vpop.permute.xlu0 %292
      %294 = vrot.lane.b32.xlu0 %v268, 124
      %v295 = vpop.permute.xlu0 %294
      %296 = vrot.lane.b32.xlu0 %v269, 124
      %v297 = vpop.permute.xlu0 %296
      %298 = vrot.lane.b32.xlu0 %v270, 124
      %v299 = vpop.permute.xlu0 %298
      %300 = vrot.lane.b32.xlu0 %v271, 124
      %v301 = vpop.permute.xlu0 %300
      %302 = vrot.lane.b32.xlu0 %v272, 124
      %v303 = vpop.permute.xlu0 %302
      %304 = vrot.lane.b32.xlu0 %v273, 124
      %v305 = vpop.permute.xlu0 %304
      %vm322 = vcmask 1040384
      %v323 = vsel %vm322, 0.0, %v275
      %v324 = vsel %vm322, 0.0, %v277
      %v325 = vsel %vm322, 0.0, %v279
      %v326 = vsel %vm322, 0.0, %v281
      %v327 = vsel %vm322, 0.0, %v283
      %v328 = vsel %vm322, 0.0, %v285
      %v329 = vsel %vm322, 0.0, %v287
      %v330 = vsel %vm322, 0.0, %v289
      %v331 = vsel %vm322, 0.0, %v291
      %v332 = vsel %vm322, 0.0, %v293
      %v333 = vsel %vm322, 0.0, %v295
      %v334 = vsel %vm322, 0.0, %v297
      %v335 = vsel %vm322, 0.0, %v299
      %v336 = vsel %vm322, 0.0, %v301
      %v337 = vsel %vm322, 0.0, %v303
      %v338 = vsel %vm322, 0.0, %v305
      %340 = vrot.lane.b32.xlu0 %v226, 4
      %v341 = vpop.permute.xlu0 %340
      %342 = vrot.lane.b32.xlu0 0.0, 4
      %v343 = vpop.permute.xlu0 %342
      %344 = vrot.lane.b32.xlu0 %v227, 4
      %v345 = vpop.permute.xlu0 %344
      %346 = vrot.lane.b32.xlu0 %v228, 4
      %v347 = vpop.permute.xlu0 %346
      %348 = vrot.lane.b32.xlu0 %v229, 4
      %v349 = vpop.permute.xlu0 %348
      %350 = vrot.lane.b32.xlu0 %v230, 4
      %v351 = vpop.permute.xlu0 %350
      %352 = vrot.lane.b32.xlu0 %v231, 4
      %v353 = vpop.permute.xlu0 %352
      %354 = vrot.lane.b32.xlu0 %v232, 4
      %v355 = vpop.permute.xlu0 %354
      %356 = vrot.lane.b32.xlu0 %v233, 4
      %v357 = vpop.permute.xlu0 %356
      %358 = vrot.lane.b32.xlu0 %v234, 4
      %v359 = vpop.permute.xlu0 %358
      %360 = vrot.lane.b32.xlu0 %v235, 4
      %v361 = vpop.permute.xlu0 %360
      %362 = vrot.lane.b32.xlu0 %v236, 4
      %v363 = vpop.permute.xlu0 %362
      %364 = vrot.lane.b32.xlu0 %v237, 4
      %v365 = vpop.permute.xlu0 %364
      %366 = vrot.lane.b32.xlu0 %v238, 4
      %v367 = vpop.permute.xlu0 %366
      %368 = vrot.lane.b32.xlu0 %v239, 4
      %v369 = vpop.permute.xlu0 %368
      %370 = vrot.lane.b32.xlu0 %v240, 4
      %v371 = vpop.permute.xlu0 %370
      %372 = vrot.lane.b32.xlu0 %v241, 4
      %v373 = vpop.permute.xlu0 %372
      %vm391 = vcmask 31744
      %v392 = vsel %vm391, %v323, %v341
      %v393 = vsel %vm391, %v275, %v343
      %v394 = vsel %vm391, %v324, %v345
      %v395 = vsel %vm391, %v277, %v343
      %v396 = vsel %vm391, %v325, %v347
      %v397 = vsel %vm391, %v279, %v343
      %v398 = vsel %vm391, %v326, %v349
      %v399 = vsel %vm391, %v281, %v343
      %v400 = vsel %vm391, %v327, %v351
      %v401 = vsel %vm391, %v283, %v343
      %v402 = vsel %vm391, %v328, %v353
      %v403 = vsel %vm391, %v285, %v343
      %v404 = vsel %vm391, %v329, %v355
      %v405 = vsel %vm391, %v287, %v343
      %v406 = vsel %vm391, %v330, %v357
      %v407 = vsel %vm391, %v289, %v343
      %v408 = vsel %vm391, %v331, %v359
      %v409 = vsel %vm391, %v291, %v343
      %v410 = vsel %vm391, %v332, %v361
      %v411 = vsel %vm391, %v293, %v343
      %v412 = vsel %vm391, %v333, %v363
      %v413 = vsel %vm391, %v295, %v343
      %v414 = vsel %vm391, %v334, %v365
      %v415 = vsel %vm391, %v297, %v343
      %v416 = vsel %vm391, %v335, %v367
      %v417 = vsel %vm391, %v299, %v343
      %v418 = vsel %vm391, %v336, %v369
      %v419 = vsel %vm391, %v301, %v343
      %v420 = vsel %vm391, %v337, %v371
      %v421 = vsel %vm391, %v303, %v343
      %v422 = vsel %vm391, %v338, %v373
      %v423 = vsel %vm391, %v305, %v343
      %vm438 = vcmask 1046528
      %v439 = vrot.slane 0.0, 1
      %v440 = vsel %vm438, %v439, %v439
      %v441 = vrot.slane %v394, 1
      %v442 = vrot.slane %v395, 1
      %v443 = vsel %vm438, %v441, %v442
      %v444 = vrot.slane %v398, 1
      %v445 = vrot.slane %v399, 1
      %v446 = vsel %vm438, %v444, %v445
      %v447 = vrot.slane %v402, 1
      %v448 = vrot.slane %v403, 1
      %v449 = vsel %vm438, %v447, %v448
      %v450 = vrot.slane %v406, 1
      %v451 = vrot.slane %v407, 1
      %v452 = vsel %vm438, %v450, %v451
      %v453 = vrot.slane %v410, 1
      %v454 = vrot.slane %v411, 1
      %v455 = vsel %vm438, %v453, %v454
      %v456 = vrot.slane %v414, 1
      %v457 = vrot.slane %v415, 1
      %v458 = vsel %vm438, %v456, %v457
      %v459 = vrot.slane %v418, 1
      %v460 = vrot.slane %v419, 1
      %v461 = vsel %vm438, %v459, %v460
      %462 = vrot.lane.b32.xlu0 %v440, 8
      %v463 = vpop.permute.xlu0 %462
      %464 = vrot.lane.b32.xlu0 %v443, 8
      %v465 = vpop.permute.xlu0 %464
      %466 = vrot.lane.b32.xlu0 %v446, 8
      %v467 = vpop.permute.xlu0 %466
      %468 = vrot.lane.b32.xlu0 %v449, 8
      %v469 = vpop.permute.xlu0 %468
      %470 = vrot.lane.b32.xlu0 %v452, 8
      %v471 = vpop.permute.xlu0 %470
      %472 = vrot.lane.b32.xlu0 %v455, 8
      %v473 = vpop.permute.xlu0 %472
      %474 = vrot.lane.b32.xlu0 %v458, 8
      %v475 = vpop.permute.xlu0 %474
      %476 = vrot.lane.b32.xlu0 %v461, 8
      %v477 = vpop.permute.xlu0 %476
      %494 = vrot.lane.b32.xlu0 %v392, 16
      %v495 = vpop.permute.xlu0 %494
      %496 = vrot.lane.b32.xlu0 %v396, 16
      %v497 = vpop.permute.xlu0 %496
      %498 = vrot.lane.b32.xlu0 %v400, 16
      %v499 = vpop.permute.xlu0 %498
      %500 = vrot.lane.b32.xlu0 %v404, 16
      %v501 = vpop.permute.xlu0 %500
      %502 = vrot.lane.b32.xlu0 %v408, 16
      %v503 = vpop.permute.xlu0 %502
      %504 = vrot.lane.b32.xlu0 %v412, 16
      %v505 = vpop.permute.xlu0 %504
      %506 = vrot.lane.b32.xlu0 %v416, 16
      %v507 = vpop.permute.xlu0 %506
      %508 = vrot.lane.b32.xlu0 %v420, 16
      %v509 = vpop.permute.xlu0 %508
      %v526 = vrot.slane %v392, 1
      %v527 = vrot.slane %v393, 1
      %v528 = vsel %vm438, %v526, %v527
      %v529 = vrot.slane %v396, 1
      %v530 = vrot.slane %v397, 1
      %v531 = vsel %vm438, %v529, %v530
      %v532 = vrot.slane %v400, 1
      %v533 = vrot.slane %v401, 1
      %v534 = vsel %vm438, %v532, %v533
      %v535 = vrot.slane %v404, 1
      %v536 = vrot.slane %v405, 1
      %v537 = vsel %vm438, %v535, %v536
      %v538 = vrot.slane %v408, 1
      %v539 = vrot.slane %v409, 1
      %v540 = vsel %vm438, %v538, %v539
      %v541 = vrot.slane %v412, 1
      %v542 = vrot.slane %v413, 1
      %v543 = vsel %vm438, %v541, %v542
      %v544 = vrot.slane %v416, 1
      %v545 = vrot.slane %v417, 1
      %v546 = vsel %vm438, %v544, %v545
      %v547 = vrot.slane %v420, 1
      %v548 = vrot.slane %v421, 1
      %v549 = vsel %vm438, %v547, %v548
      %550 = vrot.lane.b32.xlu0 %v528, 24
      %v551 = vpop.permute.xlu0 %550
      %552 = vrot.lane.b32.xlu0 %v531, 24
      %v553 = vpop.permute.xlu0 %552
      %554 = vrot.lane.b32.xlu0 %v534, 24
      %v555 = vpop.permute.xlu0 %554
      %556 = vrot.lane.b32.xlu0 %v537, 24
      %v557 = vpop.permute.xlu0 %556
      %558 = vrot.lane.b32.xlu0 %v540, 24
      %v559 = vpop.permute.xlu0 %558
      %560 = vrot.lane.b32.xlu0 %v543, 24
      %v561 = vpop.permute.xlu0 %560
      %562 = vrot.lane.b32.xlu0 %v546, 24
      %v563 = vpop.permute.xlu0 %562
      %564 = vrot.lane.b32.xlu0 %v549, 24
      %v565 = vpop.permute.xlu0 %564
      %575 = vrot.lane.b32.xlu0 %v394, 32
      %v576 = vpop.permute.xlu0 %575
      %577 = vrot.lane.b32.xlu0 %v398, 32
      %v578 = vpop.permute.xlu0 %577
      %579 = vrot.lane.b32.xlu0 %v402, 32
      %v580 = vpop.permute.xlu0 %579
      %581 = vrot.lane.b32.xlu0 %v406, 32
      %v582 = vpop.permute.xlu0 %581
      %583 = vrot.lane.b32.xlu0 %v410, 32
      %v584 = vpop.permute.xlu0 %583
      %585 = vrot.lane.b32.xlu0 %v414, 32
      %v586 = vpop.permute.xlu0 %585
      %587 = vrot.lane.b32.xlu0 %v418, 32
      %v588 = vpop.permute.xlu0 %587
      %589 = vrot.lane.b32.xlu0 %v422, 32
      %v590 = vpop.permute.xlu0 %589
      %v600 = vrot.slane %v422, 1
      %v601 = vrot.slane %v423, 1
      %v602 = vsel %vm438, %v600, %v601
      %603 = vrot.lane.b32.xlu0 %v443, 40
      %v604 = vpop.permute.xlu0 %603
      %605 = vrot.lane.b32.xlu0 %v446, 40
      %v606 = vpop.permute.xlu0 %605
      %607 = vrot.lane.b32.xlu0 %v449, 40
      %v608 = vpop.permute.xlu0 %607
      %609 = vrot.lane.b32.xlu0 %v452, 40
      %v610 = vpop.permute.xlu0 %609
      %611 = vrot.lane.b32.xlu0 %v455, 40
      %v612 = vpop.permute.xlu0 %611
      %613 = vrot.lane.b32.xlu0 %v458, 40
      %v614 = vpop.permute.xlu0 %613
      %615 = vrot.lane.b32.xlu0 %v461, 40
      %v616 = vpop.permute.xlu0 %615
      %617 = vrot.lane.b32.xlu0 %v602, 40
      %v618 = vpop.permute.xlu0 %617
      %627 = vrot.lane.b32.xlu0 %v396, 48
      %v628 = vpop.permute.xlu0 %627
      %629 = vrot.lane.b32.xlu0 %v400, 48
      %v630 = vpop.permute.xlu0 %629
      %631 = vrot.lane.b32.xlu0 %v404, 48
      %v632 = vpop.permute.xlu0 %631
      %633 = vrot.lane.b32.xlu0 %v408, 48
      %v634 = vpop.permute.xlu0 %633
      %635 = vrot.lane.b32.xlu0 %v412, 48
      %v636 = vpop.permute.xlu0 %635
      %637 = vrot.lane.b32.xlu0 %v416, 48
      %v638 = vpop.permute.xlu0 %637
      %639 = vrot.lane.b32.xlu0 %v420, 48
      %v640 = vpop.permute.xlu0 %639
      %641 = vrot.lane.b32.xlu0 0.0, 48
      %v642 = vpop.permute.xlu0 %641
      %651 = vrot.lane.b32.xlu0 %v531, 56
      %v652 = vpop.permute.xlu0 %651
      %653 = vrot.lane.b32.xlu0 %v534, 56
      %v654 = vpop.permute.xlu0 %653
      %655 = vrot.lane.b32.xlu0 %v537, 56
      %v656 = vpop.permute.xlu0 %655
      %657 = vrot.lane.b32.xlu0 %v540, 56
      %v658 = vpop.permute.xlu0 %657
      %659 = vrot.lane.b32.xlu0 %v543, 56
      %v660 = vpop.permute.xlu0 %659
      %661 = vrot.lane.b32.xlu0 %v546, 56
      %v662 = vpop.permute.xlu0 %661
      %663 = vrot.lane.b32.xlu0 %v549, 56
      %v664 = vpop.permute.xlu0 %663
      %665 = vrot.lane.b32.xlu0 %v440, 56
      %v666 = vpop.permute.xlu0 %665
      %vm675 = vcmask 64512
      %v676 = vsel %vm675, 0.0, %v463
      %v677 = vsel %vm675, %v394, %v465
      %v678 = vsel %vm675, %v398, %v467
      %v679 = vsel %vm675, %v402, %v469
      %v680 = vsel %vm675, %v406, %v471
      %v681 = vsel %vm675, %v410, %v473
      %v682 = vsel %vm675, %v414, %v475
      %v683 = vsel %vm675, %v418, %v477
      %vm684 = vcmask 130048
      %v685 = vsel %vm684, %v676, %v495
      %v686 = vsel %vm684, %v677, %v497
      %v687 = vsel %vm684, %v678, %v499
      %v688 = vsel %vm684, %v679, %v501
      %v689 = vsel %vm684, %v680, %v503
      %v690 = vsel %vm684, %v681, %v505
      %v691 = vsel %vm684, %v682, %v507
      %v692 = vsel %vm684, %v683, %v509
      %vm693 = vcmask 195584
      %v694 = vsel %vm693, %v685, %v551
      %v695 = vsel %vm693, %v686, %v553
      %v696 = vsel %vm693, %v687, %v555
      %v697 = vsel %vm693, %v688, %v557
      %v698 = vsel %vm693, %v689, %v559
      %v699 = vsel %vm693, %v690, %v561
      %v700 = vsel %vm693, %v691, %v563
      %v701 = vsel %vm693, %v692, %v565
      %vm702 = vcmask 261120
      %v703 = vsel %vm702, %v694, %v576
      %v704 = vsel %vm702, %v695, %v578
      %v705 = vsel %vm702, %v696, %v580
      %v706 = vsel %vm702, %v697, %v582
      %v707 = vsel %vm702, %v698, %v584
      %v708 = vsel %vm702, %v699, %v586
      %v709 = vsel %vm702, %v700, %v588
      %v710 = vsel %vm702, %v701, %v590
      %vm711 = vcmask 326656
      %v712 = vsel %vm711, %v703, %v604
      %v713 = vsel %vm711, %v704, %v606
      %v714 = vsel %vm711, %v705, %v608
      %v715 = vsel %vm711, %v706, %v610
      %v716 = vsel %vm711, %v707, %v612
      %v717 = vsel %vm711, %v708, %v614
      %v718 = vsel %vm711, %v709, %v616
      %v719 = vsel %vm711, %v710, %v618
      %vm720 = vcmask 392192
      %v721 = vsel %vm720, %v712, %v628
      %v722 = vsel %vm720, %v713, %v630
      %v723 = vsel %vm720, %v714, %v632
      %v724 = vsel %vm720, %v715, %v634
      %v725 = vsel %vm720, %v716, %v636
      %v726 = vsel %vm720, %v717, %v638
      %v727 = vsel %vm720, %v718, %v640
      %v728 = vsel %vm720, %v719, %v642
      %vm729 = vcmask 457728
      %v730 = vsel %vm729, %v721, %v652
      %v731 = vsel %vm729, %v722, %v654
      %v732 = vsel %vm729, %v723, %v656
      %v733 = vsel %vm729, %v724, %v658
      %v734 = vsel %vm729, %v725, %v660
      %v735 = vsel %vm729, %v726, %v662
      %v736 = vsel %vm729, %v727, %v664
      %v737 = vsel %vm729, %v728, %v666
      %v738 = vpack.c.bf16 %v731, %v730
      %v739 = vpack.c.bf16 %v733, %v732
      %v740 = vpack.c.bf16 %v735, %v734
      %v741 = vpack.c.bf16 %v737, %v736
      %v742 = vld [vmem:[%s1] sm:$0xf]
      %v743 = vld [vmem:[%s1 + $0x4] sm:$0xf]
      %v744 = vld [vmem:[%s1 + $0x8] sm:$0xf]
      %v745 = vld [vmem:[%s1 + $0xc] sm:$0xf]
      %v746 = vld [vmem:[%s1 + $0x10] sm:$0xf]
      %v747 = vld [vmem:[%s1 + $0x14] sm:$0xf]
      %v748 = vld [vmem:[%s1 + $0x18] sm:$0xf]
      %v749 = vld [vmem:[%s1 + $0x1c] sm:$0xf]
      %v750 = vld [vmem:[%s2] sm:$0x1]
      %v752 = vlaneseq
      %v753 = vshrl.u32 %v752, 7
      %v754 = vsub.s32 0, %v753
      %v755 = vrot.slane %v750, %v754
      %v765 = vunpack.c.l.b16 %v742
      %v766 = vunpack.c.l.b16 %v743
      %v767 = vunpack.c.l.b16 %v744
      %v768 = vunpack.c.l.b16 %v745
      %v769 = vunpack.c.l.b16 %v746
      %v770 = vunpack.c.l.b16 %v747
      %v771 = vunpack.c.l.b16 %v748
      %v772 = vunpack.c.l.b16 %v749
      %v773 = vpack.c.b16 %v766, %v765
      %v774 = vpack.c.b16 %v768, %v767
      %v775 = vpack.c.b16 %v770, %v769
      %v776 = vpack.c.b16 %v772, %v771
      %vm781 = vcmask 523264
      %v783 = vsel %vm781, %v738, 0
      %v786 = vsel %vm781, %v739, 0
      %v789 = vsel %vm781, %v740, 0
      %v792 = vsel %vm781, %v741, 0
      %794 = vmatprep.subr.bf16.mxu0 0
      %795 = vmatpush1.bf16.msra.mxu0 %v773
      %796 = vmatprep.subr.bf16.mxu0 0
      %797 = vmatpush1.bf16.msra.mxu0 %v774
      %798 = vmatprep.subr.bf16.mxu0 0
      %799 = vmatpush1.bf16.msra.mxu0 %v775
      %800 = vmatprep.subr.bf16.mxu0 0
      %801 = vmatpush1.bf16.msra.mxu0 %v776
      %802 = vmatprep.subr.bf16.mxu0 0
      %803 = vmatpush1.bf16.msra.mxu0 0
      %804 = vmatprep.subr.bf16.mxu0 0
      %805 = vmatpush1.bf16.msra.mxu0 0
      %806 = vmatprep.subr.bf16.mxu0 0
      %807 = vmatpush1.bf16.msra.mxu0 0
      %808 = vmatprep.subr.bf16.mxu0 0
      %809 = vmatpush1.bf16.msra.mxu0 0
      %810 = vmatprep.subr.bf16.mxu0 0
      %811 = vmatpush1.bf16.msra.mxu0 0
      %812 = vmatprep.subr.bf16.mxu0 0
      %813 = vmatpush1.bf16.msra.mxu0 0
      %814 = vmatprep.subr.bf16.mxu0 0
      %815 = vmatpush1.bf16.msra.mxu0 0
      %816 = vmatprep.subr.bf16.mxu0 0
      %817 = vmatpush1.bf16.msra.mxu0 0
      %818 = vmatprep.subr.bf16.mxu0 0
      %819 = vmatpush1.bf16.msra.mxu0 0
      %820 = vmatprep.subr.bf16.mxu0 0
      %821 = vmatpush1.bf16.msra.mxu0 0
      %822 = vmatprep.subr.bf16.mxu0 0
      %823 = vmatpush1.bf16.msra.mxu0 0
      %824 = vmatprep.subr.bf16.mxu0 0
      %825 = vmatpush1.bf16.msra.mxu0 0
      %826 = vmatprep.mubr.bf16.mxu0 0
      %827 = vmatmul.mubr.bf16.gmra.mrb[0].mxu0 %v783
      %v828 = vpop.f32.mrb[0].mxu0
      %v829 = vadd.f32 %v755, %v828
      %v830 = vpop.f32.mrb[0].mxu0
      %v831 = vpop.f32.mrb[0].mxu0
      %v832 = vadd.f32 %v755, %v831
      %v833 = vpop.f32.mrb[0].mxu0
      %834 = vmatprep.mubr.bf16.mxu0 0
      %835 = vmatmul.mubr.bf16.gmra.mrb[0].mxu0 %v786
      %v836 = vpop.f32.mrb[0].mxu0
      %v837 = vadd.f32 %v755, %v836
      %v838 = vpop.f32.mrb[0].mxu0
      %v839 = vpop.f32.mrb[0].mxu0
      %v840 = vadd.f32 %v755, %v839
      %v841 = vpop.f32.mrb[0].mxu0
      %842 = vmatprep.mubr.bf16.mxu0 0
      %843 = vmatmul.mubr.bf16.gmra.mrb[0].mxu0 %v789
      %v844 = vpop.f32.mrb[0].mxu0
      %v845 = vadd.f32 %v755, %v844
      %v846 = vpop.f32.mrb[0].mxu0
      %v847 = vpop.f32.mrb[0].mxu0
      %v848 = vadd.f32 %v755, %v847
      %v849 = vpop.f32.mrb[0].mxu0
      %850 = vmatprep.mubr.bf16.mxu0 0
      %851 = vmatmul.mubr.bf16.gmra.mrb[0].mxu0 %v792
      %v852 = vpop.f32.mrb[0].mxu0
      %v853 = vadd.f32 %v755, %v852
      %v854 = vpop.f32.mrb[0].mxu0
      %v855 = vpop.f32.mrb[0].mxu0
      %v856 = vadd.f32 %v755, %v855
      %v857 = vpop.f32.mrb[0].mxu0
      %858 = vdwg.mxu0
      %vm859 = vcmp.gt.f32.partialorder %v829, 0.0
      %vm860 = vcmp.gt.f32.partialorder %v832, 0.0
      %vm861 = vcmp.gt.f32.partialorder %v837, 0.0
      %vm862 = vcmp.gt.f32.partialorder %v840, 0.0
      %vm863 = vcmp.gt.f32.partialorder %v845, 0.0
      %vm864 = vcmp.gt.f32.partialorder %v848, 0.0
      %vm865 = vcmp.gt.f32.partialorder %v853, 0.0
      %vm866 = vcmp.gt.f32.partialorder %v856, 0.0
      %v867 = vmul.f32 %v829, 0.2
      %v868 = vmul.f32 %v832, 0.2
      %v869 = vmul.f32 %v837, 0.2
      %v870 = vmul.f32 %v840, 0.2
      %v871 = vmul.f32 %v845, 0.2
      %v872 = vmul.f32 %v848, 0.2
      %v873 = vmul.f32 %v853, 0.2
      %v874 = vmul.f32 %v856, 0.2
      %v875 = vsel %vm859, %v829, %v867
      %v876 = vsel %vm860, %v832, %v868
      %v877 = vsel %vm861, %v837, %v869
      %v878 = vsel %vm862, %v840, %v870
      %v879 = vsel %vm863, %v845, %v871
      %v880 = vsel %vm864, %v848, %v872
      %v881 = vsel %vm865, %v853, %v873
      %v882 = vsel %vm866, %v856, %v874
      %v883 = vmul.f32 %v875, 0.25
      %v884 = vmul.f32 %v876, 0.25
      %v885 = vmul.f32 %v877, 0.25
      %v886 = vmul.f32 %v878, 0.25
      %v887 = vmul.f32 %v879, 0.25
      %v888 = vmul.f32 %v880, 0.25
      %v889 = vmul.f32 %v881, 0.25
      %v890 = vmul.f32 %v875, 0.75
      %v891 = vmul.f32 %v876, 0.75
      %v892 = vmul.f32 %v877, 0.75
      %v893 = vmul.f32 %v878, 0.75
      %v894 = vmul.f32 %v879, 0.75
      %v895 = vmul.f32 %v880, 0.75
      %v896 = vmul.f32 %v881, 0.75
      %v897 = vmul.f32 %v882, 0.75
      %v898 = vadd.f32 %v883, %v890
      %v899 = vadd.f32 %v883, %v891
      %v900 = vadd.f32 %v884, %v892
      %v901 = vadd.f32 %v885, %v893
      %v902 = vadd.f32 %v886, %v894
      %v903 = vadd.f32 %v887, %v895
      %v904 = vadd.f32 %v888, %v896
      %v905 = vadd.f32 %v889, %v897
      %v906 = vmul.f32 %v882, 0.25
      %v907 = vadd.f32 %v890, %v884
      %v908 = vadd.f32 %v891, %v885
      %v909 = vadd.f32 %v892, %v886
      %v910 = vadd.f32 %v893, %v887
      %v911 = vadd.f32 %v894, %v888
      %v912 = vadd.f32 %v895, %v889
      %v913 = vadd.f32 %v896, %v906
      %v914 = vadd.f32 %v897, %v906
      %v931 = vrot.slane %v898, 7
      %v932 = vrot.slane %v907, 7
      %v933 = vrot.slane %v899, 7
      %v934 = vrot.slane %v908, 7
      %v935 = vrot.slane %v900, 7
      %v936 = vrot.slane %v909, 7
      %v937 = vrot.slane %v901, 7
      %v938 = vrot.slane %v910, 7
      %v939 = vrot.slane %v902, 7
      %v940 = vrot.slane %v911, 7
      %v941 = vrot.slane %v903, 7
      %v942 = vrot.slane %v912, 7
      %v943 = vrot.slane %v904, 7
      %v944 = vrot.slane %v913, 7
      %v945 = vrot.slane %v905, 7
      %v946 = vrot.slane %v914, 7
      %v963 = vsel %vm322, %v898, %v931
      %v964 = vsel %vm322, %v907, %v932
      %v965 = vsel %vm322, %v899, %v933
      %v966 = vsel %vm322, %v908, %v934
      %v967 = vsel %vm322, %v900, %v935
      %v968 = vsel %vm322, %v909, %v936
      %v969 = vsel %vm322, %v901, %v937
      %v970 = vsel %vm322, %v910, %v938
      %v971 = vsel %vm322, %v902, %v939
      %v972 = vsel %vm322, %v911, %v940
      %v973 = vsel %vm322, %v903, %v941
      %v974 = vsel %vm322, %v912, %v942
      %v975 = vsel %vm322, %v904, %v943
      %v976 = vsel %vm322, %v913, %v944
      %v977 = vsel %vm322, %v905, %v945
      %v978 = vsel %vm322, %v914, %v946
      %v979 = vrot.slane %v898, 1
      %v980 = vrot.slane %v907, 1
      %v981 = vrot.slane %v899, 1
      %v982 = vrot.slane %v908, 1
      %v983 = vrot.slane %v900, 1
      %v984 = vrot.slane %v909, 1
      %v985 = vrot.slane %v901, 1
      %v986 = vrot.slane %v910, 1
      %v987 = vrot.slane %v902, 1
      %v988 = vrot.slane %v911, 1
      %v989 = vrot.slane %v903, 1
      %v990 = vrot.slane %v912, 1
      %v991 = vrot.slane %v904, 1
      %v992 = vrot.slane %v913, 1
      %v993 = vrot.slane %v905, 1
      %v994 = vrot.slane %v914, 1
      %v1011 = vsel %vm438, %v979, %v898
      %v1012 = vsel %vm438, %v980, %v907
      %v1013 = vsel %vm438, %v981, %v899
      %v1014 = vsel %vm438, %v982, %v908
      %v1015 = vsel %vm438, %v983, %v900
      %v1016 = vsel %vm438, %v984, %v909
      %v1017 = vsel %vm438, %v985, %v901
      %v1018 = vsel %vm438, %v986, %v910
      %v1019 = vsel %vm438, %v987, %v902
      %v1020 = vsel %vm438, %v988, %v911
      %v1021 = vsel %vm438, %v989, %v903
      %v1022 = vsel %vm438, %v990, %v912
      %v1023 = vsel %vm438, %v991, %v904
      %v1024 = vsel %vm438, %v992, %v913
      %v1025 = vsel %vm438, %v993, %v905
      %v1026 = vsel %vm438, %v994, %v914
      %v1027 = vmul.f32 %v963, 0.25
      %v1028 = vmul.f32 %v964, 0.25
      %v1029 = vmul.f32 %v965, 0.25
      %v1030 = vmul.f32 %v966, 0.25
      %v1031 = vmul.f32 %v967, 0.25
      %v1032 = vmul.f32 %v968, 0.25
      %v1033 = vmul.f32 %v969, 0.25
      %v1034 = vmul.f32 %v970, 0.25
      %v1035 = vmul.f32 %v971, 0.25
      %v1036 = vmul.f32 %v972, 0.25
      %v1037 = vmul.f32 %v973, 0.25
      %v1038 = vmul.f32 %v974, 0.25
      %v1039 = vmul.f32 %v975, 0.25
      %v1040 = vmul.f32 %v976, 0.25
      %v1041 = vmul.f32 %v977, 0.25
      %v1042 = vmul.f32 %v978, 0.25
      %v1043 = vmul.f32 %v898, 0.75
      %v1044 = vmul.f32 %v907, 0.75
      %v1045 = vmul.f32 %v899, 0.75
      %v1046 = vmul.f32 %v908, 0.75
      %v1047 = vmul.f32 %v900, 0.75
      %v1048 = vmul.f32 %v909, 0.75
      %v1049 = vmul.f32 %v901, 0.75
      %v1050 = vmul.f32 %v910, 0.75
      %v1051 = vmul.f32 %v902, 0.75
      %v1052 = vmul.f32 %v911, 0.75
      %v1053 = vmul.f32 %v903, 0.75
      %v1054 = vmul.f32 %v912, 0.75
      %v1055 = vmul.f32 %v904, 0.75
      %v1056 = vmul.f32 %v913, 0.75
      %v1057 = vmul.f32 %v905, 0.75
      %v1058 = vmul.f32 %v914, 0.75
      %v1059 = vadd.f32 %v1027, %v1043
      %v1060 = vadd.f32 %v1028, %v1044
      %v1061 = vadd.f32 %v1029, %v1045
      %v1062 = vadd.f32 %v1030, %v1046
      %v1063 = vadd.f32 %v1031, %v1047
      %v1064 = vadd.f32 %v1032, %v1048
      %v1065 = vadd.f32 %v1033, %v1049
      %v1066 = vadd.f32 %v1034, %v1050
      %v1067 = vadd.f32 %v1035, %v1051
      %v1068 = vadd.f32 %v1036, %v1052
      %v1069 = vadd.f32 %v1037, %v1053
      %v1070 = vadd.f32 %v1038, %v1054
      %v1071 = vadd.f32 %v1039, %v1055
      %v1072 = vadd.f32 %v1040, %v1056
      %v1073 = vadd.f32 %v1041, %v1057
      %v1074 = vadd.f32 %v1042, %v1058
      %v1075 = vmul.f32 %v1011, 0.25
      %v1076 = vmul.f32 %v1012, 0.25
      %v1077 = vmul.f32 %v1013, 0.25
      %v1078 = vmul.f32 %v1014, 0.25
      %v1079 = vmul.f32 %v1015, 0.25
      %v1080 = vmul.f32 %v1016, 0.25
      %v1081 = vmul.f32 %v1017, 0.25
      %v1082 = vmul.f32 %v1018, 0.25
      %v1083 = vmul.f32 %v1019, 0.25
      %v1084 = vmul.f32 %v1020, 0.25
      %v1085 = vmul.f32 %v1021, 0.25
      %v1086 = vmul.f32 %v1022, 0.25
      %v1087 = vmul.f32 %v1023, 0.25
      %v1088 = vmul.f32 %v1024, 0.25
      %v1089 = vmul.f32 %v1025, 0.25
      %v1090 = vmul.f32 %v1026, 0.25
      %v1091 = vadd.f32 %v1043, %v1075
      %v1092 = vadd.f32 %v1044, %v1076
      %v1093 = vadd.f32 %v1045, %v1077
      %v1094 = vadd.f32 %v1046, %v1078
      %v1095 = vadd.f32 %v1047, %v1079
      %v1096 = vadd.f32 %v1048, %v1080
      %v1097 = vadd.f32 %v1049, %v1081
      %v1098 = vadd.f32 %v1050, %v1082
      %v1099 = vadd.f32 %v1051, %v1083
      %v1100 = vadd.f32 %v1052, %v1084
      %v1101 = vadd.f32 %v1053, %v1085
      %v1102 = vadd.f32 %v1054, %v1086
      %v1103 = vadd.f32 %v1055, %v1087
      %v1104 = vadd.f32 %v1056, %v1088
      %v1105 = vadd.f32 %v1057, %v1089
      %v1106 = vadd.f32 %v1058, %v1090
      %v1123 = vrot.slane %v1091, 7
      %v1124 = vrot.slane %v1092, 7
      %v1125 = vrot.slane %v1093, 7
      %v1126 = vrot.slane %v1094, 7
      %v1127 = vrot.slane %v1095, 7
      %v1128 = vrot.slane %v1096, 7
      %v1129 = vrot.slane %v1097, 7
      %v1130 = vrot.slane %v1098, 7
      %v1131 = vrot.slane %v1099, 7
      %v1132 = vrot.slane %v1100, 7
      %v1133 = vrot.slane %v1101, 7
      %v1134 = vrot.slane %v1102, 7
      %v1135 = vrot.slane %v1103, 7
      %v1136 = vrot.slane %v1104, 7
      %v1137 = vrot.slane %v1105, 7
      %v1138 = vrot.slane %v1106, 7
      %v1155 = vsel %vm322, %v1091, %v1123
      %v1156 = vsel %vm322, %v1092, %v1124
      %v1157 = vsel %vm322, %v1093, %v1125
      %v1158 = vsel %vm322, %v1094, %v1126
      %v1159 = vsel %vm322, %v1095, %v1127
      %v1160 = vsel %vm322, %v1096, %v1128
      %v1161 = vsel %vm322, %v1097, %v1129
      %v1162 = vsel %vm322, %v1098, %v1130
      %v1163 = vsel %vm322, %v1099, %v1131
      %v1164 = vsel %vm322, %v1100, %v1132
      %v1165 = vsel %vm322, %v1101, %v1133
      %v1166 = vsel %vm322, %v1102, %v1134
      %v1167 = vsel %vm322, %v1103, %v1135
      %v1168 = vsel %vm322, %v1104, %v1136
      %v1169 = vsel %vm322, %v1105, %v1137
      %v1170 = vsel %vm322, %v1106, %v1138
      %v1187 = vrot.slane %v1059, 1
      %v1188 = vrot.slane %v1060, 1
      %v1189 = vrot.slane %v1061, 1
      %v1190 = vrot.slane %v1062, 1
      %v1191 = vrot.slane %v1063, 1
      %v1192 = vrot.slane %v1064, 1
      %v1193 = vrot.slane %v1065, 1
      %v1194 = vrot.slane %v1066, 1
      %v1195 = vrot.slane %v1067, 1
      %v1196 = vrot.slane %v1068, 1
      %v1197 = vrot.slane %v1069, 1
      %v1198 = vrot.slane %v1070, 1
      %v1199 = vrot.slane %v1071, 1
      %v1200 = vrot.slane %v1072, 1
      %v1201 = vrot.slane %v1073, 1
      %v1202 = vrot.slane %v1074, 1
      %v1219 = vsel %vm438, %v1187, %v1059
      %v1220 = vsel %vm438, %v1188, %v1060
      %v1221 = vsel %vm438, %v1189, %v1061
      %v1222 = vsel %vm438, %v1190, %v1062
      %v1223 = vsel %vm438, %v1191, %v1063
      %v1224 = vsel %vm438, %v1192, %v1064
      %v1225 = vsel %vm438, %v1193, %v1065
      %v1226 = vsel %vm438, %v1194, %v1066
      %v1227 = vsel %vm438, %v1195, %v1067
      %v1228 = vsel %vm438, %v1196, %v1068
      %v1229 = vsel %vm438, %v1197, %v1069
      %v1230 = vsel %vm438, %v1198, %v1070
      %v1231 = vsel %vm438, %v1199, %v1071
      %v1232 = vsel %vm438, %v1200, %v1072
      %v1233 = vsel %vm438, %v1201, %v1073
      %v1234 = vsel %vm438, %v1202, %v1074
      %1235 = vrot.lane.b32.xlu0 %v1059, 8
      %v1236 = vpop.permute.xlu0 %1235
      %1237 = vrot.lane.b32.xlu0 %v1060, 8
      %v1238 = vpop.permute.xlu0 %1237
      %1239 = vrot.lane.b32.xlu0 %v1061, 8
      %v1240 = vpop.permute.xlu0 %1239
      %1241 = vrot.lane.b32.xlu0 %v1062, 8
      %v1242 = vpop.permute.xlu0 %1241
      %1243 = vrot.lane.b32.xlu0 %v1063, 8
      %v1244 = vpop.permute.xlu0 %1243
      %1245 = vrot.lane.b32.xlu0 %v1064, 8
      %v1246 = vpop.permute.xlu0 %1245
      %1247 = vrot.lane.b32.xlu0 %v1065, 8
      %v1248 = vpop.permute.xlu0 %1247
      %1249 = vrot.lane.b32.xlu0 %v1066, 8
      %v1250 = vpop.permute.xlu0 %1249
      %1251 = vrot.lane.b32.xlu0 %v1067, 8
      %v1252 = vpop.permute.xlu0 %1251
      %1253 = vrot.lane.b32.xlu0 %v1068, 8
      %v1254 = vpop.permute.xlu0 %1253
      %1255 = vrot.lane.b32.xlu0 %v1069, 8
      %v1256 = vpop.permute.xlu0 %1255
      %1257 = vrot.lane.b32.xlu0 %v1070, 8
      %v1258 = vpop.permute.xlu0 %1257
      %1259 = vrot.lane.b32.xlu0 %v1071, 8
      %v1260 = vpop.permute.xlu0 %1259
      %1261 = vrot.lane.b32.xlu0 %v1072, 8
      %v1262 = vpop.permute.xlu0 %1261
      %1263 = vrot.lane.b32.xlu0 %v1073, 8
      %v1264 = vpop.permute.xlu0 %1263
      %1265 = vrot.lane.b32.xlu0 %v1074, 8
      %v1266 = vpop.permute.xlu0 %1265
      %1283 = vrot.lane.b32.xlu0 %v1091, 16
      %v1284 = vpop.permute.xlu0 %1283
      %1285 = vrot.lane.b32.xlu0 %v1092, 16
      %v1286 = vpop.permute.xlu0 %1285
      %1287 = vrot.lane.b32.xlu0 %v1093, 16
      %v1288 = vpop.permute.xlu0 %1287
      %1289 = vrot.lane.b32.xlu0 %v1094, 16
      %v1290 = vpop.permute.xlu0 %1289
      %1291 = vrot.lane.b32.xlu0 %v1095, 16
      %v1292 = vpop.permute.xlu0 %1291
      %1293 = vrot.lane.b32.xlu0 %v1096, 16
      %v1294 = vpop.permute.xlu0 %1293
      %1295 = vrot.lane.b32.xlu0 %v1097, 16
      %v1296 = vpop.permute.xlu0 %1295
      %1297 = vrot.lane.b32.xlu0 %v1098, 16
      %v1298 = vpop.permute.xlu0 %1297
      %1299 = vrot.lane.b32.xlu0 %v1099, 16
      %v1300 = vpop.permute.xlu0 %1299
      %1301 = vrot.lane.b32.xlu0 %v1100, 16
      %v1302 = vpop.permute.xlu0 %1301
      %1303 = vrot.lane.b32.xlu0 %v1101, 16
      %v1304 = vpop.permute.xlu0 %1303
      %1305 = vrot.lane.b32.xlu0 %v1102, 16
      %v1306 = vpop.permute.xlu0 %1305
      %1307 = vrot.lane.b32.xlu0 %v1103, 16
      %v1308 = vpop.permute.xlu0 %1307
      %1309 = vrot.lane.b32.xlu0 %v1104, 16
      %v1310 = vpop.permute.xlu0 %1309
      %1311 = vrot.lane.b32.xlu0 %v1105, 16
      %v1312 = vpop.permute.xlu0 %1311
      %1313 = vrot.lane.b32.xlu0 %v1106, 16
      %v1314 = vpop.permute.xlu0 %1313
      %1347 = vrot.lane.b32.xlu0 %v1219, 24
      %v1348 = vpop.permute.xlu0 %1347
      %1349 = vrot.lane.b32.xlu0 %v1220, 24
      %v1350 = vpop.permute.xlu0 %1349
      %1351 = vrot.lane.b32.xlu0 %v1221, 24
      %v1352 = vpop.permute.xlu0 %1351
      %1353 = vrot.lane.b32.xlu0 %v1222, 24
      %v1354 = vpop.permute.xlu0 %1353
      %1355 = vrot.lane.b32.xlu0 %v1223, 24
      %v1356 = vpop.permute.xlu0 %1355
      %1357 = vrot.lane.b32.xlu0 %v1224, 24
      %v1358 = vpop.permute.xlu0 %1357
      %1359 = vrot.lane.b32.xlu0 %v1225, 24
      %v1360 = vpop.permute.xlu0 %1359
      %1361 = vrot.lane.b32.xlu0 %v1226, 24
      %v1362 = vpop.permute.xlu0 %1361
      %1363 = vrot.lane.b32.xlu0 %v1227, 24
      %v1364 = vpop.permute.xlu0 %1363
      %1365 = vrot.lane.b32.xlu0 %v1228, 24
      %v1366 = vpop.permute.xlu0 %1365
      %1367 = vrot.lane.b32.xlu0 %v1229, 24
      %v1368 = vpop.permute.xlu0 %1367
      %1369 = vrot.lane.b32.xlu0 %v1230, 24
      %v1370 = vpop.permute.xlu0 %1369
      %1371 = vrot.lane.b32.xlu0 %v1231, 24
      %v1372 = vpop.permute.xlu0 %1371
      %1373 = vrot.lane.b32.xlu0 %v1232, 24
      %v1374 = vpop.permute.xlu0 %1373
      %1375 = vrot.lane.b32.xlu0 %v1233, 24
      %v1376 = vpop.permute.xlu0 %1375
      %1377 = vrot.lane.b32.xlu0 %v1234, 24
      %v1378 = vpop.permute.xlu0 %1377
      %v1395 = vsel %vm675, %v1155, %v1236
      %v1396 = vsel %vm675, %v1156, %v1238
      %v1397 = vsel %vm675, %v1157, %v1240
      %v1398 = vsel %vm675, %v1158, %v1242
      %v1399 = vsel %vm675, %v1159, %v1244
      %v1400 = vsel %vm675, %v1160, %v1246
      %v1401 = vsel %vm675, %v1161, %v1248
      %v1402 = vsel %vm675, %v1162, %v1250
      %v1403 = vsel %vm675, %v1163, %v1252
      %v1404 = vsel %vm675, %v1164, %v1254
      %v1405 = vsel %vm675, %v1165, %v1256
      %v1406 = vsel %vm675, %v1166, %v1258
      %v1407 = vsel %vm675, %v1167, %v1260
      %v1408 = vsel %vm675, %v1168, %v1262
      %v1409 = vsel %vm675, %v1169, %v1264
      %v1410 = vsel %vm675, %v1170, %v1266
      %v1411 = vsel %vm684, %v1395, %v1284
      %v1412 = vsel %vm684, %v1396, %v1286
      %v1413 = vsel %vm684, %v1397, %v1288
      %v1414 = vsel %vm684, %v1398, %v1290
      %v1415 = vsel %vm684, %v1399, %v1292
      %v1416 = vsel %vm684, %v1400, %v1294
      %v1417 = vsel %vm684, %v1401, %v1296
      %v1418 = vsel %vm684, %v1402, %v1298
      %v1419 = vsel %vm684, %v1403, %v1300
      %v1420 = vsel %vm684, %v1404, %v1302
      %v1421 = vsel %vm684, %v1405, %v1304
      %v1422 = vsel %vm684, %v1406, %v1306
      %v1423 = vsel %vm684, %v1407, %v1308
      %v1424 = vsel %vm684, %v1408, %v1310
      %v1425 = vsel %vm684, %v1409, %v1312
      %v1426 = vsel %vm684, %v1410, %v1314
      %v1427 = vsel %vm693, %v1411, %v1348
      %v1428 = vsel %vm693, %v1412, %v1350
      %v1429 = vsel %vm693, %v1413, %v1352
      %v1430 = vsel %vm693, %v1414, %v1354
      %v1431 = vsel %vm693, %v1415, %v1356
      %v1432 = vsel %vm693, %v1416, %v1358
      %v1433 = vsel %vm693, %v1417, %v1360
      %v1434 = vsel %vm693, %v1418, %v1362
      %v1435 = vsel %vm693, %v1419, %v1364
      %v1436 = vsel %vm693, %v1420, %v1366
      %v1437 = vsel %vm693, %v1421, %v1368
      %v1438 = vsel %vm693, %v1422, %v1370
      %v1439 = vsel %vm693, %v1423, %v1372
      %v1440 = vsel %vm693, %v1424, %v1374
      %v1441 = vsel %vm693, %v1425, %v1376
      %v1442 = vsel %vm693, %v1426, %v1378
      %1459 = vrot.lane.b32.xlu0 %v1427, 32
      %v1460 = vpop.permute.xlu0 %1459
      %1461 = vrot.lane.b32.xlu0 %v1428, 32
      %v1462 = vpop.permute.xlu0 %1461
      %1463 = vrot.lane.b32.xlu0 %v1429, 32
      %v1464 = vpop.permute.xlu0 %1463
      %1465 = vrot.lane.b32.xlu0 %v1430, 32
      %v1466 = vpop.permute.xlu0 %1465
      %1467 = vrot.lane.b32.xlu0 %v1431, 32
      %v1468 = vpop.permute.xlu0 %1467
      %1469 = vrot.lane.b32.xlu0 %v1432, 32
      %v1470 = vpop.permute.xlu0 %1469
      %1471 = vrot.lane.b32.xlu0 %v1433, 32
      %v1472 = vpop.permute.xlu0 %1471
      %1473 = vrot.lane.b32.xlu0 %v1434, 32
      %v1474 = vpop.permute.xlu0 %1473
      %1475 = vrot.lane.b32.xlu0 %v1435, 32
      %v1476 = vpop.permute.xlu0 %1475
      %1477 = vrot.lane.b32.xlu0 %v1436, 32
      %v1478 = vpop.permute.xlu0 %1477
      %1479 = vrot.lane.b32.xlu0 %v1437, 32
      %v1480 = vpop.permute.xlu0 %1479
      %1481 = vrot.lane.b32.xlu0 %v1438, 32
      %v1482 = vpop.permute.xlu0 %1481
      %1483 = vrot.lane.b32.xlu0 %v1439, 32
      %v1484 = vpop.permute.xlu0 %1483
      %1485 = vrot.lane.b32.xlu0 %v1440, 32
      %v1486 = vpop.permute.xlu0 %1485
      %1487 = vrot.lane.b32.xlu0 %v1441, 32
      %v1488 = vpop.permute.xlu0 %1487
      %1489 = vrot.lane.b32.xlu0 %v1442, 32
      %v1490 = vpop.permute.xlu0 %1489
      %1507 = vrot.lane.b32.xlu0 %v1428, 64
      %v1508 = vpop.permute.xlu0 %1507
      %1509 = vrot.lane.b32.xlu0 %v1429, 64
      %v1510 = vpop.permute.xlu0 %1509
      %1511 = vrot.lane.b32.xlu0 %v1430, 64
      %v1512 = vpop.permute.xlu0 %1511
      %1513 = vrot.lane.b32.xlu0 %v1431, 64
      %v1514 = vpop.permute.xlu0 %1513
      %1515 = vrot.lane.b32.xlu0 %v1432, 64
      %v1516 = vpop.permute.xlu0 %1515
      %1517 = vrot.lane.b32.xlu0 %v1433, 64
      %v1518 = vpop.permute.xlu0 %1517
      %1519 = vrot.lane.b32.xlu0 %v1434, 64
      %v1520 = vpop.permute.xlu0 %1519
      %1521 = vrot.lane.b32.xlu0 %v1435, 64
      %v1522 = vpop.permute.xlu0 %1521
      %1523 = vrot.lane.b32.xlu0 %v1436, 64
      %v1524 = vpop.permute.xlu0 %1523
      %1525 = vrot.lane.b32.xlu0 %v1437, 64
      %v1526 = vpop.permute.xlu0 %1525
      %1527 = vrot.lane.b32.xlu0 %v1438, 64
      %v1528 = vpop.permute.xlu0 %1527
      %1529 = vrot.lane.b32.xlu0 %v1439, 64
      %v1530 = vpop.permute.xlu0 %1529
      %1531 = vrot.lane.b32.xlu0 %v1440, 64
      %v1532 = vpop.permute.xlu0 %1531
      %1533 = vrot.lane.b32.xlu0 %v1441, 64
      %v1534 = vpop.permute.xlu0 %1533
      %1535 = vrot.lane.b32.xlu0 %v1442, 64
      %v1536 = vpop.permute.xlu0 %1535
      %v1552 = vsel %vm702, %v1428, %v1460
      %v1553 = vsel %vm702, %v1427, %v1462
      %v1554 = vsel %vm702, %v1428, %v1464
      %v1555 = vsel %vm702, %v1429, %v1466
      %v1556 = vsel %vm702, %v1430, %v1468
      %v1557 = vsel %vm702, %v1431, %v1470
      %v1558 = vsel %vm702, %v1432, %v1472
      %v1559 = vsel %vm702, %v1433, %v1474
      %v1560 = vsel %vm702, %v1434, %v1476
      %v1561 = vsel %vm702, %v1435, %v1478
      %v1562 = vsel %vm702, %v1436, %v1480
      %v1563 = vsel %vm702, %v1437, %v1482
      %v1564 = vsel %vm702, %v1438, %v1484
      %v1565 = vsel %vm702, %v1439, %v1486
      %v1566 = vsel %vm702, %v1440, %v1488
      %v1567 = vsel %vm702, %v1441, %v1490
      %v1568 = vsel %vm781, %v1552, %v1508
      %v1569 = vsel %vm781, %v1553, %v1510
      %v1570 = vsel %vm781, %v1554, %v1512
      %v1571 = vsel %vm781, %v1555, %v1514
      %v1572 = vsel %vm781, %v1556, %v1516
      %v1573 = vsel %vm781, %v1557, %v1518
      %v1574 = vsel %vm781, %v1558, %v1520
      %v1575 = vsel %vm781, %v1559, %v1522
      %v1576 = vsel %vm781, %v1560, %v1524
      %v1577 = vsel %vm781, %v1561, %v1526
      %v1578 = vsel %vm781, %v1562, %v1528
      %v1579 = vsel %vm781, %v1563, %v1530
      %v1580 = vsel %vm781, %v1564, %v1532
      %v1581 = vsel %vm781, %v1565, %v1534
      %v1582 = vsel %vm781, %v1566, %v1536
      %v1583 = vsel %vm781, %v1567, %v1534
      %v1584 = vpack.c.bf16 %v1569, %v1568
      %v1585 = vpack.c.bf16 %v1571, %v1570
      %v1586 = vpack.c.bf16 %v1573, %v1572
      %v1587 = vpack.c.bf16 %v1575, %v1574
      %v1588 = vpack.c.bf16 %v1577, %v1576
      %v1589 = vpack.c.bf16 %v1579, %v1578
      %v1590 = vpack.c.bf16 %v1581, %v1580
      %v1591 = vpack.c.bf16 %v1583, %v1582
      %v1592 = vld [vmem:[%s3] sm:$0xf]
      %v1593 = vld [vmem:[%s3 + $0x4] sm:$0xf]
      %v1594 = vld [vmem:[%s3 + $0x8] sm:$0xf]
      %v1595 = vld [vmem:[%s3 + $0xc] sm:$0xf]
      %v1596 = vld [vmem:[%s3 + $0x10] sm:$0xf]
      %v1597 = vld [vmem:[%s3 + $0x14] sm:$0xf]
      %v1598 = vld [vmem:[%s3 + $0x18] sm:$0xf]
      %v1599 = vld [vmem:[%s3 + $0x1c] sm:$0xf]
      %v1600 = vld [vmem:[%s3 + $0x20] sm:$0xf]
      %v1601 = vld [vmem:[%s3 + $0x24] sm:$0xf]
      %v1602 = vld [vmem:[%s3 + $0x28] sm:$0xf]
      %v1603 = vld [vmem:[%s3 + $0x2c] sm:$0xf]
      %v1604 = vld [vmem:[%s4] sm:$0x1]
      %v1606 = vlaneseq
      %v1607 = vshrl.u32 %v1606, 7
      %v1608 = vsub.s32 0, %v1607
      %v1609 = vrot.slane %v1604, %v1608
      %v1623 = vunpack.c.l.b16 %v1592
      %v1624 = vunpack.c.l.b16 %v1593
      %v1625 = vunpack.c.l.b16 %v1594
      %v1626 = vunpack.c.l.b16 %v1595
      %v1627 = vunpack.c.l.b16 %v1596
      %v1628 = vunpack.c.l.b16 %v1597
      %v1629 = vunpack.c.l.b16 %v1598
      %v1630 = vunpack.c.l.b16 %v1599
      %v1631 = vunpack.c.l.b16 %v1600
      %v1632 = vunpack.c.l.b16 %v1601
      %v1633 = vunpack.c.l.b16 %v1602
      %v1634 = vunpack.c.l.b16 %v1603
      %v1635 = vpack.c.b16 %v1624, %v1623
      %v1636 = vpack.c.b16 %v1626, %v1625
      %v1637 = vpack.c.b16 %v1628, %v1627
      %v1638 = vpack.c.b16 %v1630, %v1629
      %v1639 = vpack.c.b16 %v1632, %v1631
      %v1640 = vpack.c.b16 %v1634, %v1633
      %vm1647 = vcmask 785408
      %v1649 = vsel %vm1647, %v1584, 0
      %v1652 = vsel %vm1647, %v1585, 0
      %v1655 = vsel %vm1647, %v1586, 0
      %v1658 = vsel %vm1647, %v1587, 0
      %v1661 = vsel %vm1647, %v1588, 0
      %v1664 = vsel %vm1647, %v1589, 0
      %v1667 = vsel %vm1647, %v1590, 0
      %v1670 = vsel %vm1647, %v1591, 0
      %1672 = vmatprep.subr.bf16.mxu0 0
      %1673 = vmatpush1.bf16.msra.mxu0 %v1635
      %1674 = vmatprep.subr.bf16.mxu0 0
      %1675 = vmatpush1.bf16.msra.mxu0 %v1636
      %1676 = vmatprep.subr.bf16.mxu0 0
      %1677 = vmatpush1.bf16.msra.mxu0 %v1637
      %1678 = vmatprep.subr.bf16.mxu0 0
      %1679 = vmatpush1.bf16.msra.mxu0 %v1638
      %1680 = vmatprep.subr.bf16.mxu0 0
      %1681 = vmatpush1.bf16.msra.mxu0 %v1639
      %1682 = vmatprep.subr.bf16.mxu0 0
      %1683 = vmatpush1.bf16.msra.mxu0 %v1640
      %1684 = vmatprep.subr.bf16.mxu0 0
      %1685 = vmatpush1.bf16.msra.mxu0 0
      %1686 = vmatprep.subr.bf16.mxu0 0
      %1687 = vmatpush1.bf16.msra.mxu0 0
      %1688 = vmatprep.subr.bf16.mxu0 0
      %1689 = vmatpush1.bf16.msra.mxu0 0
      %1690 = vmatprep.subr.bf16.mxu0 0
      %1691 = vmatpush1.bf16.msra.mxu0 0
      %1692 = vmatprep.subr.bf16.mxu0 0
      %1693 = vmatpush1.bf16.msra.mxu0 0
      %1694 = vmatprep.subr.bf16.mxu0 0
      %1695 = vmatpush1.bf16.msra.mxu0 0
      %1696 = vmatprep.subr.bf16.mxu0 0
      %1697 = vmatpush1.bf16.msra.mxu0 0
      %1698 = vmatprep.subr.bf16.mxu0 0
      %1699 = vmatpush1.bf16.msra.mxu0 0
      %1700 = vmatprep.subr.bf16.mxu0 0
      %1701 = vmatpush1.bf16.msra.mxu0 0
      %1702 = vmatprep.subr.bf16.mxu0 0
      %1703 = vmatpush1.bf16.msra.mxu0 0
      %1704 = vmatprep.mubr.bf16.mxu0 0
      %1705 = vmatmul.mubr.bf16.gmra.mrb[0].mxu0 %v1649
      %v1706 = vpop.f32.mrb[0].mxu0
      %v1707 = vadd.f32 %v1609, %v1706
      %v1708 = vpop.f32.mrb[0].mxu0
      %v1709 = vpop.f32.mrb[0].mxu0
      %v1710 = vadd.f32 %v1609, %v1709
      %v1711 = vpop.f32.mrb[0].mxu0
      %1712 = vmatprep.mubr.bf16.mxu0 0
      %1713 = vmatmul.mubr.bf16.gmra.mrb[0].mxu0 %v1652
      %v1714 = vpop.f32.mrb[0].mxu0
      %v1715 = vadd.f32 %v1609, %v1714
      %v1716 = vpop.f32.mrb[0].mxu0
      %v1717 = vpop.f32.mrb[0].mxu0
      %v1718 = vadd.f32 %v1609, %v1717
      %v1719 = vpop.f32.mrb[0].mxu0
      %1720 = vmatprep.mubr.bf16.mxu0 0
      %1721 = vmatmul.mubr.bf16.gmra.mrb[0].mxu0 %v1655
      %v1722 = vpop.f32.mrb[0].mxu0
      %v1723 = vadd.f32 %v1609, %v1722
      %v1724 = vpop.f32.mrb[0].mxu0
      %v1725 = vpop.f32.mrb[0].mxu0
      %v1726 = vadd.f32 %v1609, %v1725
      %v1727 = vpop.f32.mrb[0].mxu0
      %1728 = vmatprep.mubr.bf16.mxu0 0
      %1729 = vmatmul.mubr.bf16.gmra.mrb[0].mxu0 %v1658
      %v1730 = vpop.f32.mrb[0].mxu0
      %v1731 = vadd.f32 %v1609, %v1730
      %v1732 = vpop.f32.mrb[0].mxu0
      %v1733 = vpop.f32.mrb[0].mxu0
      %v1734 = vadd.f32 %v1609, %v1733
      %v1735 = vpop.f32.mrb[0].mxu0
      %1736 = vmatprep.mubr.bf16.mxu0 0
      %1737 = vmatmul.mubr.bf16.gmra.mrb[0].mxu0 %v1661
      %v1738 = vpop.f32.mrb[0].mxu0
      %v1739 = vadd.f32 %v1609, %v1738
      %v1740 = vpop.f32.mrb[0].mxu0
      %v1741 = vpop.f32.mrb[0].mxu0
      %v1742 = vadd.f32 %v1609, %v1741
      %v1743 = vpop.f32.mrb[0].mxu0
      %1744 = vmatprep.mubr.bf16.mxu0 0
      %1745 = vmatmul.mubr.bf16.gmra.mrb[0].mxu0 %v1664
      %v1746 = vpop.f32.mrb[0].mxu0
      %v1747 = vadd.f32 %v1609, %v1746
      %v1748 = vpop.f32.mrb[0].mxu0
      %v1749 = vpop.f32.mrb[0].mxu0
      %v1750 = vadd.f32 %v1609, %v1749
      %v1751 = vpop.f32.mrb[0].mxu0
      %1752 = vmatprep.mubr.bf16.mxu0 0
      %1753 = vmatmul.mubr.bf16.gmra.mrb[0].mxu0 %v1667
      %v1754 = vpop.f32.mrb[0].mxu0
      %v1755 = vadd.f32 %v1609, %v1754
      %v1756 = vpop.f32.mrb[0].mxu0
      %v1757 = vpop.f32.mrb[0].mxu0
      %v1758 = vadd.f32 %v1609, %v1757
      %v1759 = vpop.f32.mrb[0].mxu0
      %1760 = vmatprep.mubr.bf16.mxu0 0
      %1761 = vmatmul.mubr.bf16.gmra.mrb[0].mxu0 %v1670
      %v1762 = vpop.f32.mrb[0].mxu0
      %v1763 = vadd.f32 %v1609, %v1762
      %v1764 = vpop.f32.mrb[0].mxu0
      %v1765 = vpop.f32.mrb[0].mxu0
      %v1766 = vadd.f32 %v1609, %v1765
      %v1767 = vpop.f32.mrb[0].mxu0
      %1768 = vdwg.mxu0
      %vm1769 = vcmp.gt.f32.partialorder %v1707, 0.0
      %vm1770 = vcmp.gt.f32.partialorder %v1710, 0.0
      %vm1771 = vcmp.gt.f32.partialorder %v1715, 0.0
      %vm1772 = vcmp.gt.f32.partialorder %v1718, 0.0
      %vm1773 = vcmp.gt.f32.partialorder %v1723, 0.0
      %vm1774 = vcmp.gt.f32.partialorder %v1726, 0.0
      %vm1775 = vcmp.gt.f32.partialorder %v1731, 0.0
      %vm1776 = vcmp.gt.f32.partialorder %v1734, 0.0
      %vm1777 = vcmp.gt.f32.partialorder %v1739, 0.0
      %vm1778 = vcmp.gt.f32.partialorder %v1742, 0.0
      %vm1779 = vcmp.gt.f32.partialorder %v1747, 0.0
      %vm1780 = vcmp.gt.f32.partialorder %v1750, 0.0
      %vm1781 = vcmp.gt.f32.partialorder %v1755, 0.0
      %vm1782 = vcmp.gt.f32.partialorder %v1758, 0.0
      %vm1783 = vcmp.gt.f32.partialorder %v1763, 0.0
      %vm1784 = vcmp.gt.f32.partialorder %v1766, 0.0
      %v1785 = vmul.f32 %v1707, 0.2
      %v1786 = vmul.f32 %v1710, 0.2
      %v1787 = vmul.f32 %v1715, 0.2
      %v1788 = vmul.f32 %v1718, 0.2
      %v1789 = vmul.f32 %v1723, 0.2
      %v1790 = vmul.f32 %v1726, 0.2
      %v1791 = vmul.f32 %v1731, 0.2
      %v1792 = vmul.f32 %v1734, 0.2
      %v1793 = vmul.f32 %v1739, 0.2
      %v1794 = vmul.f32 %v1742, 0.2
      %v1795 = vmul.f32 %v1747, 0.2
      %v1796 = vmul.f32 %v1750, 0.2
      %v1797 = vmul.f32 %v1755, 0.2
      %v1798 = vmul.f32 %v1758, 0.2
      %v1799 = vmul.f32 %v1763, 0.2
      %v1800 = vmul.f32 %v1766, 0.2
      %v1801 = vsel %vm1769, %v1707, %v1785
      %v1802 = vsel %vm1770, %v1710, %v1786
      %v1803 = vsel %vm1771, %v1715, %v1787
      %v1804 = vsel %vm1772, %v1718, %v1788
      %v1805 = vsel %vm1773, %v1723, %v1789
      %v1806 = vsel %vm1774, %v1726, %v1790
      %v1807 = vsel %vm1775, %v1731, %v1791
      %v1808 = vsel %vm1776, %v1734, %v1792
      %v1809 = vsel %vm1777, %v1739, %v1793
      %v1810 = vsel %vm1778, %v1742, %v1794
      %v1811 = vsel %vm1779, %v1747, %v1795
      %v1812 = vsel %vm1780, %v1750, %v1796
      %v1813 = vsel %vm1781, %v1755, %v1797
      %v1814 = vsel %vm1782, %v1758, %v1798
      %v1815 = vsel %vm1783, %v1763, %v1799
      %v1816 = vsel %vm1784, %v1766, %v1800
      %1833 = vrot.lane.b32.xlu0 %v1801, 4
      %v1834 = vpop.permute.xlu0 %1833
      %1835 = vrot.lane.b32.xlu0 %v1802, 4
      %v1836 = vpop.permute.xlu0 %1835
      %1837 = vrot.lane.b32.xlu0 %v1803, 4
      %v1838 = vpop.permute.xlu0 %1837
      %1839 = vrot.lane.b32.xlu0 %v1804, 4
      %v1840 = vpop.permute.xlu0 %1839
      %1841 = vrot.lane.b32.xlu0 %v1805, 4
      %v1842 = vpop.permute.xlu0 %1841
      %1843 = vrot.lane.b32.xlu0 %v1806, 4
      %v1844 = vpop.permute.xlu0 %1843
      %1845 = vrot.lane.b32.xlu0 %v1807, 4
      %v1846 = vpop.permute.xlu0 %1845
      %1847 = vrot.lane.b32.xlu0 %v1808, 4
      %v1848 = vpop.permute.xlu0 %1847
      %1849 = vrot.lane.b32.xlu0 %v1809, 4
      %v1850 = vpop.permute.xlu0 %1849
      %1851 = vrot.lane.b32.xlu0 %v1810, 4
      %v1852 = vpop.permute.xlu0 %1851
      %1853 = vrot.lane.b32.xlu0 %v1811, 4
      %v1854 = vpop.permute.xlu0 %1853
      %1855 = vrot.lane.b32.xlu0 %v1812, 4
      %v1856 = vpop.permute.xlu0 %1855
      %1857 = vrot.lane.b32.xlu0 %v1813, 4
      %v1858 = vpop.permute.xlu0 %1857
      %1859 = vrot.lane.b32.xlu0 %v1814, 4
      %v1860 = vpop.permute.xlu0 %1859
      %1861 = vrot.lane.b32.xlu0 %v1815, 4
      %v1862 = vpop.permute.xlu0 %1861
      %1863 = vrot.lane.b32.xlu0 %v1816, 4
      %v1864 = vpop.permute.xlu0 %1863
      %1881 = vrot.lane.b32.xlu0 %v1801, 8
      %v1882 = vpop.permute.xlu0 %1881
      %1883 = vrot.lane.b32.xlu0 %v1802, 8
      %v1884 = vpop.permute.xlu0 %1883
      %1885 = vrot.lane.b32.xlu0 %v1803, 8
      %v1886 = vpop.permute.xlu0 %1885
      %1887 = vrot.lane.b32.xlu0 %v1804, 8
      %v1888 = vpop.permute.xlu0 %1887
      %1889 = vrot.lane.b32.xlu0 %v1805, 8
      %v1890 = vpop.permute.xlu0 %1889
      %1891 = vrot.lane.b32.xlu0 %v1806, 8
      %v1892 = vpop.permute.xlu0 %1891
      %1893 = vrot.lane.b32.xlu0 %v1807, 8
      %v1894 = vpop.permute.xlu0 %1893
      %1895 = vrot.lane.b32.xlu0 %v1808, 8
      %v1896 = vpop.permute.xlu0 %1895
      %1897 = vrot.lane.b32.xlu0 %v1809, 8
      %v1898 = vpop.permute.xlu0 %1897
      %1899 = vrot.lane.b32.xlu0 %v1810, 8
      %v1900 = vpop.permute.xlu0 %1899
      %1901 = vrot.lane.b32.xlu0 %v1811, 8
      %v1902 = vpop.permute.xlu0 %1901
      %1903 = vrot.lane.b32.xlu0 %v1812, 8
      %v1904 = vpop.permute.xlu0 %1903
      %1905 = vrot.lane.b32.xlu0 %v1813, 8
      %v1906 = vpop.permute.xlu0 %1905
      %1907 = vrot.lane.b32.xlu0 %v1814, 8
      %v1908 = vpop.permute.xlu0 %1907
      %1909 = vrot.lane.b32.xlu0 %v1815, 8
      %v1910 = vpop.permute.xlu0 %1909
      %1911 = vrot.lane.b32.xlu0 %v1816, 8
      %v1912 = vpop.permute.xlu0 %1911
      %v1929 = vsel %vm391, %v226, %v1834
      %v1930 = vsel %vm391, %v227, %v1836
      %v1931 = vsel %vm391, %v228, %v1838
      %v1932 = vsel %vm391, %v229, %v1840
      %v1933 = vsel %vm391, %v230, %v1842
      %v1934 = vsel %vm391, %v231, %v1844
      %v1935 = vsel %vm391, %v232, %v1846
      %v1936 = vsel %vm391, %v233, %v1848
      %v1937 = vsel %vm391, %v234, %v1850
      %v1938 = vsel %vm391, %v235, %v1852
      %v1939 = vsel %vm391, %v236, %v1854
      %v1940 = vsel %vm391, %v237, %v1856
      %v1941 = vsel %vm391, %v238, %v1858
      %v1942 = vsel %vm391, %v239, %v1860
      %v1943 = vsel %vm391, %v240, %v1862
      %v1944 = vsel %vm391, %v241, %v1864
      %v1945 = vsel %vm675, %v1929, %v341
      %v1946 = vsel %vm675, %v1930, %v345
      %v1947 = vsel %vm675, %v1931, %v347
      %v1948 = vsel %vm675, %v1932, %v349
      %v1949 = vsel %vm675, %v1933, %v351
      %v1950 = vsel %vm675, %v1934, %v353
      %v1951 = vsel %vm675, %v1935, %v355
      %v1952 = vsel %vm675, %v1936, %v357
      %v1953 = vsel %vm675, %v1937, %v359
      %v1954 = vsel %vm675, %v1938, %v361
      %v1955 = vsel %vm675, %v1939, %v363
      %v1956 = vsel %vm675, %v1940, %v365
      %v1957 = vsel %vm675, %v1941, %v367
      %v1958 = vsel %vm675, %v1942, %v369
      %v1959 = vsel %vm675, %v1943, %v371
      %v1960 = vsel %vm675, %v1944, %v373
      %vm1961 = vcmask 97280
      %v1962 = vsel %vm1961, %v1945, %v1882
      %v1963 = vsel %vm1961, %v1946, %v1884
      %v1964 = vsel %vm1961, %v1947, %v1886
      %v1965 = vsel %vm1961, %v1948, %v1888
      %v1966 = vsel %vm1961, %v1949, %v1890
      %v1967 = vsel %vm1961, %v1950, %v1892
      %v1968 = vsel %vm1961, %v1951, %v1894
      %v1969 = vsel %vm1961, %v1952, %v1896
      %v1970 = vsel %vm1961, %v1953, %v1898
      %v1971 = vsel %vm1961, %v1954, %v1900
      %v1972 = vsel %vm1961, %v1955, %v1902
      %v1973 = vsel %vm1961, %v1956, %v1904
      %v1974 = vsel %vm1961, %v1957, %v1906
      %v1975 = vsel %vm1961, %v1958, %v1908
      %v1976 = vsel %vm1961, %v1959, %v1910
      %v1977 = vsel %vm1961, %v1960, %v1912
      %1978 = vst.msk [vmem:[%s224] sm:$0xff] %vm684, %v1962
      %1979 = vst.msk [vmem:[%s224 + $0x8] sm:$0xff] %vm684, %v1963
      %1980 = vst.msk [vmem:[%s224 + $0x10] sm:$0xff] %vm684, %v1964
      %1981 = vst.msk [vmem:[%s224 + $0x18] sm:$0xff] %vm684, %v1965
      %1982 = vst.msk [vmem:[%s224 + $0x20] sm:$0xff] %vm684, %v1966
      %1983 = vst.msk [vmem:[%s224 + $0x28] sm:$0xff] %vm684, %v1967
      %1984 = vst.msk [vmem:[%s224 + $0x30] sm:$0xff] %vm684, %v1968
      %1985 = vst.msk [vmem:[%s224 + $0x38] sm:$0xff] %vm684, %v1969
      %1986 = vst.msk [vmem:[%s224 + $0x40] sm:$0xff] %vm684, %v1970
      %1987 = vst.msk [vmem:[%s224 + $0x48] sm:$0xff] %vm684, %v1971
      %1988 = vst.msk [vmem:[%s224 + $0x50] sm:$0xff] %vm684, %v1972
      %1989 = vst.msk [vmem:[%s224 + $0x58] sm:$0xff] %vm684, %v1973
      %1990 = vst.msk [vmem:[%s224 + $0x60] sm:$0xff] %vm684, %v1974
      %1991 = vst.msk [vmem:[%s224 + $0x68] sm:$0xff] %vm684, %v1975
      %1992 = vst.msk [vmem:[%s224 + $0x70] sm:$0xff] %vm684, %v1976
      %1993 = vst.msk [vmem:[%s224 + $0x78] sm:$0xff] %vm684, %v1977
      %p1994 = scmp.lt.s32.totalorder %s16, 1
      %s1995 = scalar_select %p1994, %s16, 1
      %s1996 = smul.addr %s1995, 16
      %s1997 = smul.addr %s1996, 8
      %s1998 = scalar_lea.vmem %s5, %s1997
      // Predicated region
      $region41: #{unet_skip_concat_block_forward.1} parent=39 // pred_check
        %p1999 = pneg %p144
      $region42: #{unet_skip_concat_block_forward.1} parent=39 // pred_check_branch
        %2001 = sbr.rel (%p1999) target = $region44
      $region43: #{unet_skip_concat_block_forward.1} parent=39 // pred_region
        _
      $region44: #{unet_skip_concat_block_forward.1} parent=39 // pred_fallthru
        _
    $region40: #{unet_skip_concat_block_forward.1} parent=5 // pred_fallthru
      _
    %p2002 = scmp.le.s32.totalorder 2, %s11
    // Predicated region
    $region45: #{unet_skip_concat_block_forward.1} parent=5 // pred_check
      %p2003 = pneg %p2002
    $region46: #{unet_skip_concat_block_forward.1} parent=5 // pred_check_branch
      %2005 = sbr.rel (%p2003) target = $region48
    $region47: #{unet_skip_concat_block_forward.1} parent=5 // pred_region
      %s2006 = ssub.s32 %s11, 2
      // Predicated region
      $region49: #{unet_skip_concat_block_forward.1} parent=47 // pred_check
        %p2007 = pneg %p150
      $region50: #{unet_skip_concat_block_forward.1} parent=47 // pred_check_branch
        %2009 = sbr.rel (%p2007) target = $region52
      $region51: #{unet_skip_concat_block_forward.1} parent=47 // pred_region
        %p2010 = scmp.lt.s32.totalorder %s17, 1
        %s2011 = scalar_select %p2010, %s17, 1
        %s2012 = smul.addr %s2011, 16
        %s2013 = smul.addr %s2012, 8
        %s2014 = scalar_lea.vmem %s5, %s2013
      $region52: #{unet_skip_concat_block_forward.1} parent=47 // pred_fallthru
        _
    $region48: #{unet_skip_concat_block_forward.1} parent=5 // pred_fallthru
      _
  $region6: #{unet_skip_concat_block_forward.1} parent=0 // loop_footer
    %s15 = sadd.s32 1, %s11
  $region7: #{unet_skip_concat_block_forward.1} parent=0 // loop_footer_branch
    %10 = sbr.rel target = $region3
  $region8: #{unet_skip_concat_block_forward.1} parent=0 // loop_exit
    _

</llo_original>
